<compile_context>
chip_gen: v7x
topology: tpu7x:2x2x1
jax: 0.10.0
libtpu: 0.0.40
codegen_flags: <defaults>
</compile_context>

<pallas_src>
import jax
import jax.numpy as jnp
from jax.experimental import pallas as pl
from jax.experimental.pallas import tpu as pltpu


def _round_up(n: int, m: int) -> int:
    return ((n + m - 1) // m) * m


def dense_sigmoid_kernel(x_ref, w_ref, b_ref, o_ref):
    """x_ref: (TM, D) VMEM; w_ref: (1, D) VMEM; b_ref: (1,) SMEM; o_ref: (1, TM) VMEM."""
    # VPU elementwise multiply (weight row broadcasts over the TM rows), then an
    # XLU lane reduction over the feature axis. No MXU involvement.
    prod = x_ref[...] * w_ref[...]                       # (TM, D) f32
    z = jnp.sum(prod, axis=-1, keepdims=True)            # (TM, 1) f32 lane reduce
    # Relayout to lane-dense (1, TM) FIRST, then bias + sigmoid run on only
    # ceil(TM/128) vregs instead of TM/8 single-live-lane vregs.
    z_row = jnp.transpose(z, (1, 0))                     # (1, TM) via XLU
    o_ref[...] = jax.nn.sigmoid(z_row + b_ref[0]).astype(o_ref.dtype)


def single_dense_layer_forward(x, weight, bias, *, min_kernel_bytes: int = 256 * 1024):
    """Forward pass of SingleDenseLayerBinaryClassificationModel.

    x: [B, D] float32; weight: [1, D] (PyTorch Linear layout); bias: [1].
    Returns [B] float32 == sigmoid(x @ W^T + b).reshape(-1).
    """
    B, D = x.shape
    assert weight.shape == (1, D)

    x = x.astype(jnp.float32)
    w = weight.astype(jnp.float32)                       # keep [1, D]: no transpose copy
    b = jnp.reshape(bias, (1,)).astype(jnp.float32)

    # VMEM budget for the double-buffered x tile. A (TM, D) f32 tile occupies
    # TM * round_up(D, 128) * 4 bytes in VMEM (lane padding).
    d_pad = _round_up(D, 128)
    tile_budget_bytes = 12 * 1024 * 1024                 # 2 buffers -> <=24 MiB, fits 32 MiB scoped
    tm_budget = (tile_budget_bytes // (2 * d_pad * 4)) // 128 * 128

    x_bytes = B * D * 4
    if x_bytes < min_kernel_bytes or tm_budget < 128:
        # Toy sizes (or absurdly wide D): kernel dispatch overhead dominates,
        # let XLA fuse the matvec + sigmoid.
        return jax.nn.sigmoid(x @ w.T + b).reshape(-1)

    tm_budget = min(tm_budget, 8192)                     # diminishing returns beyond ~4 MiB/tile
    # Aim for ~8 grid tiles so the "parallel" batch axis feeds both v7x
    # TensorCores, but never shrink below 2048 rows (per-step overhead) or
    # above the VMEM budget.
    tm_parallel = _round_up(pl.cdiv(B, 8), 128)
    tm = max(2048, min(tm_budget, tm_parallel))
    tm = min(tm, tm_budget)
    tm = min(tm, _round_up(B, 128))                      # don't allocate a mostly-empty tile

    grid = (pl.cdiv(B, tm),)
    b_out = grid[0] * tm                                 # pad ONLY the tiny output row

    out = pl.pallas_call(
        dense_sigmoid_kernel,
        out_shape=jax.ShapeDtypeStruct((1, b_out), jnp.float32),
        grid=grid,
        in_specs=[
            pl.BlockSpec((tm, D), lambda i: (i, 0)),               # x row tile (edge block ragged)
            pl.BlockSpec((1, D), lambda i: (0, 0)),                # weight, resident
            pl.BlockSpec(memory_space=pltpu.MemorySpace.SMEM),     # bias scalar
        ],
        out_specs=pl.BlockSpec((1, tm), lambda i: (0, i)),         # lane-dense row, unmasked vst
        compiler_params=pltpu.CompilerParams(
            dimension_semantics=("parallel",),
            vmem_limit_bytes=32 * 1024 * 1024,
        ),
    )(x, w, b)

    return out[0, :B]


if __name__ == "__main__":
    key = jax.random.PRNGKey(0)
    k_x, k_w, k_b = jax.random.split(key, 3)

    batch = 8
    input_size = 32

    # Deterministic inputs / params (shapes match torch.nn.Linear(input_size, 1)).
    x = jax.random.normal(k_x, (batch, input_size), dtype=jnp.float32)
    bound = 1.0 / jnp.sqrt(jnp.float32(input_size))
    weight = jax.random.uniform(k_w, (1, input_size), minval=-bound, maxval=bound,
                                dtype=jnp.float32)
    bias = jax.random.uniform(k_b, (1,), minval=-bound, maxval=bound,
                              dtype=jnp.float32)

    # Small-batch path (XLA fallback — kernel overhead would dominate here).
    y = single_dense_layer_forward(x, weight, bias)
    y = jax.block_until_ready(y)
    y_ref = jax.nn.sigmoid(x @ weight.T + bias).reshape(-1)
    assert y.shape == (batch,)
    assert jnp.allclose(y, y_ref, atol=1e-6), (y, y_ref)

    # Kernel path, exact-multiple batch (grid > 1, no ragged tail).
    k_x2 = jax.random.fold_in(key, 7)
    x_mid = jax.random.normal(k_x2, (8192, input_size), dtype=jnp.float32)
    y_mid = jax.block_until_ready(single_dense_layer_forward(x_mid, weight, bias))
    y_mid_ref = jax.nn.sigmoid(x_mid @ weight.T + bias).reshape(-1)
    assert y_mid.shape == (8192,)
    assert jnp.allclose(y_mid, y_mid_ref, atol=1e-5), "mid-batch mismatch"

    # Kernel path, ragged tail (grid > 1, edge block + padded output slice).
    k_x3 = jax.random.fold_in(key, 13)
    x_big = jax.random.normal(k_x3, (20000, input_size), dtype=jnp.float32)
    y_big = jax.block_until_ready(single_dense_layer_forward(x_big, weight, bias))
    y_big_ref = jax.nn.sigmoid(x_big @ weight.T + bias).reshape(-1)
    assert y_big.shape == (20000,)
    assert jnp.allclose(y_big, y_big_ref, atol=1e-5), "large-batch mismatch"

    print("KERNEL_OK")
</pallas_src>

<mosaic_0001>
module attributes {stable_mosaic.version = 11 : i64} {
  func.func @dense_sigmoid_kernel(%arg0: i32, %arg1: memref<2048x32xf32, #tpu.memory_space<vmem>>, %arg2: memref<1x32xf32, #tpu.memory_space<vmem>>, %arg3: memref<1xf32, #tpu.memory_space<smem>>, %arg4: memref<1x2048xf32, #tpu.memory_space<vmem>>) attributes {dimension_semantics = [#tpu.dimension_semantics<parallel>], iteration_bounds = array<i64: 4>, scalar_prefetch = 0 : i64, scratch_operands = 0 : i64, tpu.core_type = #tpu.core_type<tc>, window_params = [{transform_indices = @transform_0, window_bounds = array<i64: 2048, 32>}, {pipeline_mode = #tpu.pipeline_mode<synchronous>, transform_indices = @transform_1, window_bounds = array<i64: 1, 32>}, {transform_indices = @transform_2, window_bounds = array<i64: 1>}, {transform_indices = @transform_3, window_bounds = array<i64: 1, 2048>}]} {
    %c0 = arith.constant 0 : index
    %c0_0 = arith.constant 0 : index
    %0 = vector.load %arg1[%c0, %c0_0] : memref<2048x32xf32, #tpu.memory_space<vmem>>, vector<2048x32xf32>
    %c0_1 = arith.constant 0 : index
    %c0_2 = arith.constant 0 : index
    %1 = vector.load %arg2[%c0_1, %c0_2] : memref<1x32xf32, #tpu.memory_space<vmem>>, vector<1x32xf32>
    %2 = vector.broadcast %1 : vector<1x32xf32> to vector<2048x32xf32>
    %3 = arith.mulf %0, %2 : vector<2048x32xf32>
    %cst = arith.constant dense<0.000000e+00> : vector<2048xf32>
    %4 = vector.multi_reduction <add>, %3, %cst [1] : vector<2048x32xf32> to vector<2048xf32>
    %5 = vector.shape_cast %4 : vector<2048xf32> to vector<2048x1xf32>
    %6 = tpu.transpose %5, [1, 0] : vector<2048x1xf32> -> vector<1x2048xf32>
    %c0_3 = arith.constant 0 : index
    %7 = memref.load %arg3[%c0_3] : memref<1xf32, #tpu.memory_space<smem>>
    %8 = vector.broadcast %7 : f32 to vector<1x2048xf32>
    %9 = arith.addf %6, %8 : vector<1x2048xf32>
    %10 = arith.negf %9 : vector<1x2048xf32>
    %11 = math.exp %10 : vector<1x2048xf32>
    %cst_4 = arith.constant 1.000000e+00 : f32
    %12 = vector.broadcast %cst_4 : f32 to vector<1x2048xf32>
    %13 = arith.addf %12, %11 : vector<1x2048xf32>
    %14 = arith.divf %12, %13 : vector<1x2048xf32>
    %c0_5 = arith.constant 0 : index
    %c0_6 = arith.constant 0 : index
    %15 = vector.load %arg4[%c0_5, %c0_6] : memref<1x2048xf32, #tpu.memory_space<vmem>>, vector<1x2048xf32>
    tpu.vector_store %arg4[%c0_5, %c0_6], %14 {strides = array<i32>} : memref<1x2048xf32, #tpu.memory_space<vmem>>, vector<1x2048xf32>,
    return
  }
  func.func @transform_0(%arg0: i32) -> (i32, i32) {
    %c0_i32 = arith.constant 0 : i32
    %c0_i32_0 = arith.constant 0 : i32
    return %arg0, %c0_i32 : i32, i32
  }
  func.func @transform_1(%arg0: i32) -> (i32, i32) {
    %c0_i32 = arith.constant 0 : i32
    %c0_i32_0 = arith.constant 0 : i32
    %c0_i32_1 = arith.constant 0 : i32
    return %c0_i32, %c0_i32_0 : i32, i32
  }
  func.func @transform_2(%arg0: i32) -> i32 {
    %c0_i32 = arith.constant 0 : i32
    %c0_i32_0 = arith.constant 0 : i32
    return %c0_i32 : i32
  }
  func.func @transform_3(%arg0: i32) -> (i32, i32) {
    %c0_i32 = arith.constant 0 : i32
    %c0_i32_0 = arith.constant 0 : i32
    return %c0_i32, %arg0 : i32, i32
  }
}

</mosaic_0001>

<llo_original>
// kernel: tpu_custom_call.1
$region0: #{tpu_custom_call.1}
  #allocation0 [shape = 'u32[]', space=smem, size = 0x4, offset = 0x4, fixed_abs, tag = 'smem constant byte address 0x4 - core index']
  #allocation1 [shape = 'u32[144,128]{1,0:T(1,128)}', space=vmem, size = 0x12000, scoped, tag = 'internal scratch']
  #allocation2 [shape = 'f32[1]{0:T(128)S(6)}', space=smem, size = 0x200, scoped, tag = 'scoped memory for tpu_custom_call.1']
  %s0 = inlined_call_operand.vmem [shape: f32[8192,32], index: 0, kind: input, shape index: {}]
  %s1 = inlined_call_operand.vmem [shape: f32[1,32], index: 1, kind: input, shape index: {}]
  %s2 = inlined_call_operand.<no memory space> [shape: f32[1], index: 2, kind: input, shape index: {}]
  %s3 = inlined_call_operand.hbm [shape: f32[1,8192], index: 3, kind: output, shape index: {}]
  %s4 = sld [smem:[#allocation0]]
  $region45: #{tpu_custom_call.1} parent=0
    _
  %s6 = ssub.s32 1, %s4
  %s7 = scalar_select 0, %s6, %s4
  %8 = sst [smem:[#allocation2]] %s2
  $region1: #{tpu_custom_call.1} parent=0
    #allocation3 [shape = 'u8[16384]{0}', space=vmem, size = 0x4000, scoped, tag = 'output window, operand 0']
    #allocation4 [shape = 's32[2]{0}', space=sflag, size = 0x8, scoped, tag = 'scoped memory for tpu_custom_call.1']
    %9 = vsyncpa [#allocation4], 0
    %s10 = scalar_lea.sflag [#allocation4], 1
    %11 = vsyncpa %s10, 0
    loop: start=0, step=1, limit=6
    $region2: #{tpu_custom_call.1} parent=1 // loop_pre_header
      _
    $region3: #{tpu_custom_call.1} parent=1 // loop_header
      %s13 = sphi 0, %s17
      %p14 = scmp.ge.s32.totalorder %s13, 6
      %s23 = sphi 0, %s25
      %s26 = sphi 0, %s23
      %s27 = sphi 0, %s26
      %s43 = sphi 0, %s27
      %s47 = sphi 0, %s47
      %s49 = sphi 0, %s47
      %s50 = sphi 0, %s49
      %s64 = sphi 0, %s50
      %s68 = sphi 0, %s68
      %s70 = sphi 0, %s68
      %s71 = sphi 0, %s70
      %s85 = sphi 0, %s71
      %s91 = sphi 0, %s93
      %s94 = sphi 0, %s91
      %s95 = sphi 0, %s94
      %s111 = sphi 0, %s95
    $region4: #{tpu_custom_call.1} parent=1 // loop_header_branch
      %16 = sbr.rel (%p14) target = $region8
    $region5: #{tpu_custom_call.1} parent=1 // loop_body
      %s18 = ssub.s32 %s13, 1
      %s19 = ssub.s32 %s13, 2
      %s20 = sadd.s32 %s13, 1
      %s21 = ssub.s32 %s13, %s20
      %p22 = scmp.eq.s32.totalorder %s21, 0
      %s24 = sadd.s32 %s23, 1
      %s25 = scalar_select %p22, %s23, %s24
      %p28 = pneg %p22
      %p29 = scmp.eq.s32.totalorder %s13, 3
      %p30 = por %p28, %p29
      %p31 = scmp.ne.s32.totalorder %s23, %s26
      %p32 = scmp.eq.s32.totalorder %s13, 0
      %p33 = por %p31, %p32
      %p34 = scmp.ne.s32.totalorder %s23, %s26
      %p35 = scmp.eq.s32.totalorder %s18, 3
      %p36 = por %p34, %p35
      %p37 = scmp.ne.s32.totalorder %s26, %s27
      %p38 = scmp.eq.s32.totalorder %s18, 0
      %p39 = por %p37, %p38
      %p40 = scmp.ne.s32.totalorder %s26, %s27
      %p41 = scmp.eq.s32.totalorder %s19, 3
      %p42 = por %p40, %p41
      %p44 = scmp.ne.s32.totalorder %s27, %s43
      %p45 = scmp.eq.s32.totalorder %s19, 0
      %p46 = por %p44, %p45
      %s48 = sadd.s32 %s47, 1
      %p51 = scmp.eq.s32.totalorder %s13, 3
      %p52 = scmp.ne.s32.totalorder %s47, %s49
      %p53 = scmp.eq.s32.totalorder %s13, 0
      %p54 = por %p52, %p53
      %p55 = scmp.ne.s32.totalorder %s47, %s49
      %p56 = scmp.eq.s32.totalorder %s18, 3
      %p57 = por %p55, %p56
      %p58 = scmp.ne.s32.totalorder %s49, %s50
      %p59 = scmp.eq.s32.totalorder %s18, 0
      %p60 = por %p58, %p59
      %p61 = scmp.ne.s32.totalorder %s49, %s50
      %p62 = scmp.eq.s32.totalorder %s19, 3
      %p63 = por %p61, %p62
      %p65 = scmp.ne.s32.totalorder %s50, %s64
      %p66 = scmp.eq.s32.totalorder %s19, 0
      %p67 = por %p65, %p66
      %s69 = sadd.s32 %s68, 1
      %p72 = scmp.eq.s32.totalorder %s13, 3
      %p73 = scmp.ne.s32.totalorder %s68, %s70
      %p74 = scmp.eq.s32.totalorder %s13, 0
      %p75 = por %p73, %p74
      %p76 = scmp.ne.s32.totalorder %s68, %s70
      %p77 = scmp.eq.s32.totalorder %s18, 3
      %p78 = por %p76, %p77
      %p79 = scmp.ne.s32.totalorder %s70, %s71
      %p80 = scmp.eq.s32.totalorder %s18, 0
      %p81 = por %p79, %p80
      %p82 = scmp.ne.s32.totalorder %s70, %s71
      %p83 = scmp.eq.s32.totalorder %s19, 3
      %p84 = por %p82, %p83
      %p86 = scmp.ne.s32.totalorder %s71, %s85
      %p87 = scmp.eq.s32.totalorder %s19, 0
      %p88 = por %p86, %p87
      %s89 = ssub.s32 %s13, %s20
      %p90 = scmp.eq.s32.totalorder %s89, 0
      %s92 = sadd.s32 %s91, 1
      %s93 = scalar_select %p90, %s91, %s92
      %p96 = pneg %p90
      %p97 = scmp.eq.s32.totalorder %s13, 3
      %p98 = por %p96, %p97
      %p99 = scmp.ne.s32.totalorder %s91, %s94
      %p100 = scmp.eq.s32.totalorder %s13, 0
      %p101 = por %p99, %p100
      %p102 = scmp.ne.s32.totalorder %s91, %s94
      %p103 = scmp.eq.s32.totalorder %s18, 3
      %p104 = por %p102, %p103
      %p105 = scmp.ne.s32.totalorder %s94, %s95
      %p106 = scmp.eq.s32.totalorder %s18, 0
      %p107 = por %p105, %p106
      %p108 = scmp.ne.s32.totalorder %s94, %s95
      %p109 = scmp.eq.s32.totalorder %s19, 3
      %p110 = por %p108, %p109
      %p112 = scmp.ne.s32.totalorder %s95, %s111
      %p113 = scmp.eq.s32.totalorder %s19, 0
      %p114 = por %p112, %p113
      %p115 = scmp.le.s32.totalorder 1, %s13
      %p116 = scmp.lt.s32.totalorder %s13, 5
      %p117 = pnand %p115, %p116
      %p118 = pneg %p117
      // Predicated region
      $region9: #{tpu_custom_call.1} parent=5 // pred_check
        _
      $region10: #{tpu_custom_call.1} parent=5 // pred_check_branch
        %120 = sbr.rel (%p117) target = $region12
      $region11: #{tpu_custom_call.1} parent=5 // pred_region
        %s121 = ssub.s32 %s13, 1
        // Predicated region
        $region13: #{tpu_custom_call.1} parent=11 // pred_check
          %p122 = pneg %p60
        $region14: #{tpu_custom_call.1} parent=11 // pred_check_branch
          %124 = sbr.rel (%p122) target = $region16
        $region15: #{tpu_custom_call.1} parent=11 // pred_region
          _
        $region16: #{tpu_custom_call.1} parent=11 // pred_fallthru
          _
        // Predicated region
        $region17: #{tpu_custom_call.1} parent=11 // pred_check
          %p125 = pneg %p81
        $region18: #{tpu_custom_call.1} parent=11 // pred_check_branch
          %127 = sbr.rel (%p125) target = $region20
        $region19: #{tpu_custom_call.1} parent=11 // pred_region
          _
        $region20: #{tpu_custom_call.1} parent=11 // pred_fallthru
          _
      $region12: #{tpu_custom_call.1} parent=5 // pred_fallthru
        _
      %p128 = scmp.lt.s32.totalorder %s13, 4
      // Predicated region
      $region21: #{tpu_custom_call.1} parent=5 // pred_check
        %p129 = pneg %p128
      $region22: #{tpu_custom_call.1} parent=5 // pred_check_branch
        %131 = sbr.rel (%p129) target = $region24
      $region23: #{tpu_custom_call.1} parent=5 // pred_region
        // Predicated region
        $region25: #{tpu_custom_call.1} parent=23 // pred_check
          %p132 = pneg %p33
        $region26: #{tpu_custom_call.1} parent=23 // pred_check_branch
          %134 = sbr.rel (%p132) target = $region28
        $region27: #{tpu_custom_call.1} parent=23 // pred_region
          %s135 = smul.u32 256, %s13
          %p136 = scmp.lt.s32.totalorder %s135, 1023
          %s137 = scalar_select %p136, %s135, 1023
          %s138 = smul.addr %s137, 8
          %s139 = scalar_lea.vmem %s0, %s138
          %s140 = smul.u32 256, %s13
        $region28: #{tpu_custom_call.1} parent=23 // pred_fallthru
          _
      $region24: #{tpu_custom_call.1} parent=5 // pred_fallthru
        _
      %p141 = scmp.le.s32.totalorder 1, %s13
      %p142 = scmp.lt.s32.totalorder %s13, 5
      %p143 = pnand %p141, %p142
      %p144 = pneg %p143
      // Predicated region
      $region29: #{tpu_custom_call.1} parent=5 // pred_check
        _
      $region30: #{tpu_custom_call.1} parent=5 // pred_check_branch
        %146 = sbr.rel (%p143) target = $region32
      $region31: #{tpu_custom_call.1} parent=5 // pred_region
        %s147 = ssub.s32 %s13, 1
        %s148 = smul.u32 256, %s18
        %p149 = scmp.lt.s32.totalorder %s148, 1023
        %s150 = scalar_select %p149, %s148, 1023
        %s151 = smul.addr %s150, 8
        %s152 = scalar_lea.vmem %s0, %s151
        %p153 = pneg %p39
        %p154 = pneg %p36
        %p155 = pneg %p60
        %p156 = pneg %p57
        %p157 = pneg %p81
        %p158 = pneg %p78
        %p159 = pneg %p107
        %p160 = pneg %p104
        %s161 = sand.u32 %s94, 1
        %s162 = scalar_lea.sflag [#allocation4], %s161
        %s163 = sand.u32 %s94, 1
        %s164 = smul.addr %s163, 16
        %s165 = scalar_lea.vmem [#allocation3], %s164
        %s166 = smul.u32 256, %s18
        %p167 = scmp.lt.s32.totalorder %s166, 1023
        %s168 = scalar_select %p167, %s166, 1023
        %s169 = smul.addr %s168, 8
        %s170 = scalar_lea.vmem %s0, %s169
        %s171 = smul.u32 256, %s18
        %s172 = smul.u32 16, %s18
        %v173 = vld [vmem:[%s170] sm:$0xff]
        %v174 = vld [vmem:[%s170 + $0x8] sm:$0xff]
        %v175 = vld [vmem:[%s170 + $0x10] sm:$0xff]
        %v176 = vld [vmem:[%s170 + $0x18] sm:$0xff]
        %v177 = vld [vmem:[%s170 + $0x20] sm:$0xff]
        %v178 = vld [vmem:[%s170 + $0x28] sm:$0xff]
        %v179 = vld [vmem:[%s170 + $0x30] sm:$0xff]
        %v180 = vld [vmem:[%s170 + $0x38] sm:$0xff]
        %v181 = vld [vmem:[%s170 + $0x40] sm:$0xff]
        %v182 = vld [vmem:[%s170 + $0x48] sm:$0xff]
        %v183 = vld [vmem:[%s170 + $0x50] sm:$0xff]
        %v184 = vld [vmem:[%s170 + $0x58] sm:$0xff]
        %v185 = vld [vmem:[%s170 + $0x60] sm:$0xff]
        %v186 = vld [vmem:[%s170 + $0x68] sm:$0xff]
        %v187 = vld [vmem:[%s170 + $0x70] sm:$0xff]
        %v188 = vld [vmem:[%s170 + $0x78] sm:$0xff]
        %v189 = vld [vmem:[%s170 + $0x80] sm:$0xff]
        %v190 = vld [vmem:[%s170 + $0x88] sm:$0xff]
        %v191 = vld [vmem:[%s170 + $0x90] sm:$0xff]
        %v192 = vld [vmem:[%s170 + $0x98] sm:$0xff]
        %v193 = vld [vmem:[%s170 + $0xa0] sm:$0xff]
        %v194 = vld [vmem:[%s170 + $0xa8] sm:$0xff]
        %v195 = vld [vmem:[%s170 + $0xb0] sm:$0xff]
        %v196 = vld [vmem:[%s170 + $0xb8] sm:$0xff]
        %v197 = vld [vmem:[%s170 + $0xc0] sm:$0xff]
        %v198 = vld [vmem:[%s170 + $0xc8] sm:$0xff]
        %v199 = vld [vmem:[%s170 + $0xd0] sm:$0xff]
        %v200 = vld [vmem:[%s170 + $0xd8] sm:$0xff]
        %v201 = vld [vmem:[%s170 + $0xe0] sm:$0xff]
        %v202 = vld [vmem:[%s170 + $0xe8] sm:$0xff]
        %v203 = vld [vmem:[%s170 + $0xf0] sm:$0xff]
        %v204 = vld [vmem:[%s170 + $0xf8] sm:$0xff]
        %v205 = vld [vmem:[%s170 + $0x100] sm:$0xff]
        %v206 = vld [vmem:[%s170 + $0x108] sm:$0xff]
        %v207 = vld [vmem:[%s170 + $0x110] sm:$0xff]
        %v208 = vld [vmem:[%s170 + $0x118] sm:$0xff]
        %v209 = vld [vmem:[%s170 + $0x120] sm:$0xff]
        %v210 = vld [vmem:[%s170 + $0x128] sm:$0xff]
        %v211 = vld [vmem:[%s170 + $0x130] sm:$0xff]
        %v212 = vld [vmem:[%s170 + $0x138] sm:$0xff]
        %v213 = vld [vmem:[%s170 + $0x140] sm:$0xff]
        %v214 = vld [vmem:[%s170 + $0x148] sm:$0xff]
        %v215 = vld [vmem:[%s170 + $0x150] sm:$0xff]
        %v216 = vld [vmem:[%s170 + $0x158] sm:$0xff]
        %v217 = vld [vmem:[%s170 + $0x160] sm:$0xff]
        %v218 = vld [vmem:[%s170 + $0x168] sm:$0xff]
        %v219 = vld [vmem:[%s170 + $0x170] sm:$0xff]
        %v220 = vld [vmem:[%s170 + $0x178] sm:$0xff]
        %v221 = vld [vmem:[%s170 + $0x180] sm:$0xff]
        %v222 = vld [vmem:[%s170 + $0x188] sm:$0xff]
        %v223 = vld [vmem:[%s170 + $0x190] sm:$0xff]
        %v224 = vld [vmem:[%s170 + $0x198] sm:$0xff]
        %v225 = vld [vmem:[%s170 + $0x1a0] sm:$0xff]
        %v226 = vld [vmem:[%s170 + $0x1a8] sm:$0xff]
        %v227 = vld [vmem:[%s170 + $0x1b0] sm:$0xff]
        %v228 = vld [vmem:[%s170 + $0x1b8] sm:$0xff]
        %v229 = vld [vmem:[%s170 + $0x1c0] sm:$0xff]
        %v230 = vld [vmem:[%s170 + $0x1c8] sm:$0xff]
        %v231 = vld [vmem:[%s170 + $0x1d0] sm:$0xff]
        %v232 = vld [vmem:[%s170 + $0x1d8] sm:$0xff]
        %v233 = vld [vmem:[%s170 + $0x1e0] sm:$0xff]
        %v234 = vld [vmem:[%s170 + $0x1e8] sm:$0xff]
        %v235 = vld [vmem:[%s170 + $0x1f0] sm:$0xff]
        %v236 = vld [vmem:[%s170 + $0x1f8] sm:$0xff]
        %v237 = vld [vmem:[%s170 + $0x200] sm:$0xff]
        %v238 = vld [vmem:[%s170 + $0x208] sm:$0xff]
        %v239 = vld [vmem:[%s170 + $0x210] sm:$0xff]
        %v240 = vld [vmem:[%s170 + $0x218] sm:$0xff]
        %v241 = vld [vmem:[%s170 + $0x220] sm:$0xff]
        %v242 = vld [vmem:[%s170 + $0x228] sm:$0xff]
        %v243 = vld [vmem:[%s170 + $0x230] sm:$0xff]
        %v244 = vld [vmem:[%s170 + $0x238] sm:$0xff]
        %v245 = vld [vmem:[%s170 + $0x240] sm:$0xff]
        %v246 = vld [vmem:[%s170 + $0x248] sm:$0xff]
        %v247 = vld [vmem:[%s170 + $0x250] sm:$0xff]
        %v248 = vld [vmem:[%s170 + $0x258] sm:$0xff]
        %v249 = vld [vmem:[%s170 + $0x260] sm:$0xff]
        %v250 = vld [vmem:[%s170 + $0x268] sm:$0xff]
        %v251 = vld [vmem:[%s170 + $0x270] sm:$0xff]
        %v252 = vld [vmem:[%s170 + $0x278] sm:$0xff]
        %v253 = vld [vmem:[%s170 + $0x280] sm:$0xff]
        %v254 = vld [vmem:[%s170 + $0x288] sm:$0xff]
        %v255 = vld [vmem:[%s170 + $0x290] sm:$0xff]
        %v256 = vld [vmem:[%s170 + $0x298] sm:$0xff]
        %v257 = vld [vmem:[%s170 + $0x2a0] sm:$0xff]
        %v258 = vld [vmem:[%s170 + $0x2a8] sm:$0xff]
        %v259 = vld [vmem:[%s170 + $0x2b0] sm:$0xff]
        %v260 = vld [vmem:[%s170 + $0x2b8] sm:$0xff]
        %v261 = vld [vmem:[%s170 + $0x2c0] sm:$0xff]
        %v262 = vld [vmem:[%s170 + $0x2c8] sm:$0xff]
        %v263 = vld [vmem:[%s170 + $0x2d0] sm:$0xff]
        %v264 = vld [vmem:[%s170 + $0x2d8] sm:$0xff]
        %v265 = vld [vmem:[%s170 + $0x2e0] sm:$0xff]
        %v266 = vld [vmem:[%s170 + $0x2e8] sm:$0xff]
        %v267 = vld [vmem:[%s170 + $0x2f0] sm:$0xff]
        %v268 = vld [vmem:[%s170 + $0x2f8] sm:$0xff]
        %v269 = vld [vmem:[%s170 + $0x300] sm:$0xff]
        %v270 = vld [vmem:[%s170 + $0x308] sm:$0xff]
        %v271 = vld [vmem:[%s170 + $0x310] sm:$0xff]
        %v272 = vld [vmem:[%s170 + $0x318] sm:$0xff]
        %v273 = vld [vmem:[%s170 + $0x320] sm:$0xff]
        %v274 = vld [vmem:[%s170 + $0x328] sm:$0xff]
        %v275 = vld [vmem:[%s170 + $0x330] sm:$0xff]
        %v276 = vld [vmem:[%s170 + $0x338] sm:$0xff]
        %v277 = vld [vmem:[%s170 + $0x340] sm:$0xff]
        %v278 = vld [vmem:[%s170 + $0x348] sm:$0xff]
        %v279 = vld [vmem:[%s170 + $0x350] sm:$0xff]
        %v280 = vld [vmem:[%s170 + $0x358] sm:$0xff]
        %v281 = vld [vmem:[%s170 + $0x360] sm:$0xff]
        %v282 = vld [vmem:[%s170 + $0x368] sm:$0xff]
        %v283 = vld [vmem:[%s170 + $0x370] sm:$0xff]
        %v284 = vld [vmem:[%s170 + $0x378] sm:$0xff]
        %v285 = vld [vmem:[%s170 + $0x380] sm:$0xff]
        %v286 = vld [vmem:[%s170 + $0x388] sm:$0xff]
        %v287 = vld [vmem:[%s170 + $0x390] sm:$0xff]
        %v288 = vld [vmem:[%s170 + $0x398] sm:$0xff]
        %v289 = vld [vmem:[%s170 + $0x3a0] sm:$0xff]
        %v290 = vld [vmem:[%s170 + $0x3a8] sm:$0xff]
        %v291 = vld [vmem:[%s170 + $0x3b0] sm:$0xff]
        %v292 = vld [vmem:[%s170 + $0x3b8] sm:$0xff]
        %v293 = vld [vmem:[%s170 + $0x3c0] sm:$0xff]
        %v294 = vld [vmem:[%s170 + $0x3c8] sm:$0xff]
        %v295 = vld [vmem:[%s170 + $0x3d0] sm:$0xff]
        %v296 = vld [vmem:[%s170 + $0x3d8] sm:$0xff]
        %v297 = vld [vmem:[%s170 + $0x3e0] sm:$0xff]
        %v298 = vld [vmem:[%s170 + $0x3e8] sm:$0xff]
        %v299 = vld [vmem:[%s170 + $0x3f0] sm:$0xff]
        %v300 = vld [vmem:[%s170 + $0x3f8] sm:$0xff]
        %v301 = vld [vmem:[%s170 + $0x400] sm:$0xff]
        %v302 = vld [vmem:[%s170 + $0x408] sm:$0xff]
        %v303 = vld [vmem:[%s170 + $0x410] sm:$0xff]
        %v304 = vld [vmem:[%s170 + $0x418] sm:$0xff]
        %v305 = vld [vmem:[%s170 + $0x420] sm:$0xff]
        %v306 = vld [vmem:[%s170 + $0x428] sm:$0xff]
        %v307 = vld [vmem:[%s170 + $0x430] sm:$0xff]
        %v308 = vld [vmem:[%s170 + $0x438] sm:$0xff]
        %v309 = vld [vmem:[%s170 + $0x440] sm:$0xff]
        %v310 = vld [vmem:[%s170 + $0x448] sm:$0xff]
        %v311 = vld [vmem:[%s170 + $0x450] sm:$0xff]
        %v312 = vld [vmem:[%s170 + $0x458] sm:$0xff]
        %v313 = vld [vmem:[%s170 + $0x460] sm:$0xff]
        %v314 = vld [vmem:[%s170 + $0x468] sm:$0xff]
        %v315 = vld [vmem:[%s170 + $0x470] sm:$0xff]
        %v316 = vld [vmem:[%s170 + $0x478] sm:$0xff]
        %v317 = vld [vmem:[%s170 + $0x480] sm:$0xff]
        %v318 = vld [vmem:[%s170 + $0x488] sm:$0xff]
        %v319 = vld [vmem:[%s170 + $0x490] sm:$0xff]
        %v320 = vld [vmem:[%s170 + $0x498] sm:$0xff]
        %v321 = vld [vmem:[%s170 + $0x4a0] sm:$0xff]
        %v322 = vld [vmem:[%s170 + $0x4a8] sm:$0xff]
        %v323 = vld [vmem:[%s170 + $0x4b0] sm:$0xff]
        %v324 = vld [vmem:[%s170 + $0x4b8] sm:$0xff]
        %v325 = vld [vmem:[%s170 + $0x4c0] sm:$0xff]
        %v326 = vld [vmem:[%s170 + $0x4c8] sm:$0xff]
        %v327 = vld [vmem:[%s170 + $0x4d0] sm:$0xff]
        %v328 = vld [vmem:[%s170 + $0x4d8] sm:$0xff]
        %v329 = vld [vmem:[%s170 + $0x4e0] sm:$0xff]
        %v330 = vld [vmem:[%s170 + $0x4e8] sm:$0xff]
        %v331 = vld [vmem:[%s170 + $0x4f0] sm:$0xff]
        %v332 = vld [vmem:[%s170 + $0x4f8] sm:$0xff]
        %v333 = vld [vmem:[%s170 + $0x500] sm:$0xff]
        %v334 = vld [vmem:[%s170 + $0x508] sm:$0xff]
        %v335 = vld [vmem:[%s170 + $0x510] sm:$0xff]
        %v336 = vld [vmem:[%s170 + $0x518] sm:$0xff]
        %v337 = vld [vmem:[%s170 + $0x520] sm:$0xff]
        %v338 = vld [vmem:[%s170 + $0x528] sm:$0xff]
        %v339 = vld [vmem:[%s170 + $0x530] sm:$0xff]
        %v340 = vld [vmem:[%s170 + $0x538] sm:$0xff]
        %v341 = vld [vmem:[%s170 + $0x540] sm:$0xff]
        %v342 = vld [vmem:[%s170 + $0x548] sm:$0xff]
        %v343 = vld [vmem:[%s170 + $0x550] sm:$0xff]
        %v344 = vld [vmem:[%s170 + $0x558] sm:$0xff]
        %v345 = vld [vmem:[%s170 + $0x560] sm:$0xff]
        %v346 = vld [vmem:[%s170 + $0x568] sm:$0xff]
        %v347 = vld [vmem:[%s170 + $0x570] sm:$0xff]
        %v348 = vld [vmem:[%s170 + $0x578] sm:$0xff]
        %v349 = vld [vmem:[%s170 + $0x580] sm:$0xff]
        %v350 = vld [vmem:[%s170 + $0x588] sm:$0xff]
        %v351 = vld [vmem:[%s170 + $0x590] sm:$0xff]
        %v352 = vld [vmem:[%s170 + $0x598] sm:$0xff]
        %v353 = vld [vmem:[%s170 + $0x5a0] sm:$0xff]
        %v354 = vld [vmem:[%s170 + $0x5a8] sm:$0xff]
        %v355 = vld [vmem:[%s170 + $0x5b0] sm:$0xff]
        %v356 = vld [vmem:[%s170 + $0x5b8] sm:$0xff]
        %v357 = vld [vmem:[%s170 + $0x5c0] sm:$0xff]
        %v358 = vld [vmem:[%s170 + $0x5c8] sm:$0xff]
        %v359 = vld [vmem:[%s170 + $0x5d0] sm:$0xff]
        %v360 = vld [vmem:[%s170 + $0x5d8] sm:$0xff]
        %v361 = vld [vmem:[%s170 + $0x5e0] sm:$0xff]
        %v362 = vld [vmem:[%s170 + $0x5e8] sm:$0xff]
        %v363 = vld [vmem:[%s170 + $0x5f0] sm:$0xff]
        %v364 = vld [vmem:[%s170 + $0x5f8] sm:$0xff]
        %v365 = vld [vmem:[%s170 + $0x600] sm:$0xff]
        %v366 = vld [vmem:[%s170 + $0x608] sm:$0xff]
        %v367 = vld [vmem:[%s170 + $0x610] sm:$0xff]
        %v368 = vld [vmem:[%s170 + $0x618] sm:$0xff]
        %v369 = vld [vmem:[%s170 + $0x620] sm:$0xff]
        %v370 = vld [vmem:[%s170 + $0x628] sm:$0xff]
        %v371 = vld [vmem:[%s170 + $0x630] sm:$0xff]
        %v372 = vld [vmem:[%s170 + $0x638] sm:$0xff]
        %v373 = vld [vmem:[%s170 + $0x640] sm:$0xff]
        %v374 = vld [vmem:[%s170 + $0x648] sm:$0xff]
        %v375 = vld [vmem:[%s170 + $0x650] sm:$0xff]
        %v376 = vld [vmem:[%s170 + $0x658] sm:$0xff]
        %v377 = vld [vmem:[%s170 + $0x660] sm:$0xff]
        %v378 = vld [vmem:[%s170 + $0x668] sm:$0xff]
        %v379 = vld [vmem:[%s170 + $0x670] sm:$0xff]
        %v380 = vld [vmem:[%s170 + $0x678] sm:$0xff]
        %v381 = vld [vmem:[%s170 + $0x680] sm:$0xff]
        %v382 = vld [vmem:[%s170 + $0x688] sm:$0xff]
        %v383 = vld [vmem:[%s170 + $0x690] sm:$0xff]
        %v384 = vld [vmem:[%s170 + $0x698] sm:$0xff]
        %v385 = vld [vmem:[%s170 + $0x6a0] sm:$0xff]
        %v386 = vld [vmem:[%s170 + $0x6a8] sm:$0xff]
        %v387 = vld [vmem:[%s170 + $0x6b0] sm:$0xff]
        %v388 = vld [vmem:[%s170 + $0x6b8] sm:$0xff]
        %v389 = vld [vmem:[%s170 + $0x6c0] sm:$0xff]
        %v390 = vld [vmem:[%s170 + $0x6c8] sm:$0xff]
        %v391 = vld [vmem:[%s170 + $0x6d0] sm:$0xff]
        %v392 = vld [vmem:[%s170 + $0x6d8] sm:$0xff]
        %v393 = vld [vmem:[%s170 + $0x6e0] sm:$0xff]
        %v394 = vld [vmem:[%s170 + $0x6e8] sm:$0xff]
        %v395 = vld [vmem:[%s170 + $0x6f0] sm:$0xff]
        %v396 = vld [vmem:[%s170 + $0x6f8] sm:$0xff]
        %v397 = vld [vmem:[%s170 + $0x700] sm:$0xff]
        %v398 = vld [vmem:[%s170 + $0x708] sm:$0xff]
        %v399 = vld [vmem:[%s170 + $0x710] sm:$0xff]
        %v400 = vld [vmem:[%s170 + $0x718] sm:$0xff]
        %v401 = vld [vmem:[%s170 + $0x720] sm:$0xff]
        %v402 = vld [vmem:[%s170 + $0x728] sm:$0xff]
        %v403 = vld [vmem:[%s170 + $0x730] sm:$0xff]
        %v404 = vld [vmem:[%s170 + $0x738] sm:$0xff]
        %v405 = vld [vmem:[%s170 + $0x740] sm:$0xff]
        %v406 = vld [vmem:[%s170 + $0x748] sm:$0xff]
        %v407 = vld [vmem:[%s170 + $0x750] sm:$0xff]
        %v408 = vld [vmem:[%s170 + $0x758] sm:$0xff]
        %v409 = vld [vmem:[%s170 + $0x760] sm:$0xff]
        %v410 = vld [vmem:[%s170 + $0x768] sm:$0xff]
        %v411 = vld [vmem:[%s170 + $0x770] sm:$0xff]
        %v412 = vld [vmem:[%s170 + $0x778] sm:$0xff]
        %v413 = vld [vmem:[%s170 + $0x780] sm:$0xff]
        %v414 = vld [vmem:[%s170 + $0x788] sm:$0xff]
        %v415 = vld [vmem:[%s170 + $0x790] sm:$0xff]
        %v416 = vld [vmem:[%s170 + $0x798] sm:$0xff]
        %v417 = vld [vmem:[%s170 + $0x7a0] sm:$0xff]
        %v418 = vld [vmem:[%s170 + $0x7a8] sm:$0xff]
        %v419 = vld [vmem:[%s170 + $0x7b0] sm:$0xff]
        %v420 = vld [vmem:[%s170 + $0x7b8] sm:$0xff]
        %v421 = vld [vmem:[%s170 + $0x7c0] sm:$0xff]
        %v422 = vld [vmem:[%s170 + $0x7c8] sm:$0xff]
        %v423 = vld [vmem:[%s170 + $0x7d0] sm:$0xff]
        %v424 = vld [vmem:[%s170 + $0x7d8] sm:$0xff]
        %v425 = vld [vmem:[%s170 + $0x7e0] sm:$0xff]
        %v426 = vld [vmem:[%s170 + $0x7e8] sm:$0xff]
        %v427 = vld [vmem:[%s170 + $0x7f0] sm:$0xff]
        %v428 = vld [vmem:[%s170 + $0x7f8] sm:$0xff]
        %v429 = vld [vmem:[%s1] sm:$0x1]
        %v431 = vlaneseq
        %v432 = vshrl.u32 %v431, 7
        %v433 = vsub.s32 0, %v432
        %v434 = vrot.slane %v429, %v433
        %v436 = vmul.f32 %v173, %v434
        %v437 = vmul.f32 %v174, %v434
        %v438 = vmul.f32 %v175, %v434
        %v439 = vmul.f32 %v176, %v434
        %v440 = vmul.f32 %v177, %v434
        %v441 = vmul.f32 %v178, %v434
        %v442 = vmul.f32 %v179, %v434
        %v443 = vmul.f32 %v180, %v434
        %v444 = vmul.f32 %v181, %v434
        %v445 = vmul.f32 %v182, %v434
        %v446 = vmul.f32 %v183, %v434
        %v447 = vmul.f32 %v184, %v434
        %v448 = vmul.f32 %v185, %v434
        %v449 = vmul.f32 %v186, %v434
        %v450 = vmul.f32 %v187, %v434
        %v451 = vmul.f32 %v188, %v434
        %v452 = vmul.f32 %v189, %v434
        %v453 = vmul.f32 %v190, %v434
        %v454 = vmul.f32 %v191, %v434
        %v455 = vmul.f32 %v192, %v434
        %v456 = vmul.f32 %v193, %v434
        %v457 = vmul.f32 %v194, %v434
        %v458 = vmul.f32 %v195, %v434
        %v459 = vmul.f32 %v196, %v434
        %v460 = vmul.f32 %v197, %v434
        %v461 = vmul.f32 %v198, %v434
        %v462 = vmul.f32 %v199, %v434
        %v463 = vmul.f32 %v200, %v434
        %v464 = vmul.f32 %v201, %v434
        %v465 = vmul.f32 %v202, %v434
        %v466 = vmul.f32 %v203, %v434
        %v467 = vmul.f32 %v204, %v434
        %v468 = vmul.f32 %v205, %v434
        %v469 = vmul.f32 %v206, %v434
        %v470 = vmul.f32 %v207, %v434
        %v471 = vmul.f32 %v208, %v434
        %v472 = vmul.f32 %v209, %v434
        %v473 = vmul.f32 %v210, %v434
        %v474 = vmul.f32 %v211, %v434
        %v475 = vmul.f32 %v212, %v434
        %v476 = vmul.f32 %v213, %v434
        %v477 = vmul.f32 %v214, %v434
        %v478 = vmul.f32 %v215, %v434
        %v479 = vmul.f32 %v216, %v434
        %v480 = vmul.f32 %v217, %v434
        %v481 = vmul.f32 %v218, %v434
        %v482 = vmul.f32 %v219, %v434
        %v483 = vmul.f32 %v220, %v434
        %v484 = vmul.f32 %v221, %v434
        %v485 = vmul.f32 %v222, %v434
        %v486 = vmul.f32 %v223, %v434
        %v487 = vmul.f32 %v224, %v434
        %v488 = vmul.f32 %v225, %v434
        %v489 = vmul.f32 %v226, %v434
        %v490 = vmul.f32 %v227, %v434
        %v491 = vmul.f32 %v228, %v434
        %v492 = vmul.f32 %v229, %v434
        %v493 = vmul.f32 %v230, %v434
        %v494 = vmul.f32 %v231, %v434
        %v495 = vmul.f32 %v232, %v434
        %v496 = vmul.f32 %v233, %v434
        %v497 = vmul.f32 %v234, %v434
        %v498 = vmul.f32 %v235, %v434
        %v499 = vmul.f32 %v236, %v434
        %v500 = vmul.f32 %v237, %v434
        %v501 = vmul.f32 %v238, %v434
        %v502 = vmul.f32 %v239, %v434
        %v503 = vmul.f32 %v240, %v434
        %v504 = vmul.f32 %v241, %v434
        %v505 = vmul.f32 %v242, %v434
        %v506 = vmul.f32 %v243, %v434
        %v507 = vmul.f32 %v244, %v434
        %v508 = vmul.f32 %v245, %v434
        %v509 = vmul.f32 %v246, %v434
        %v510 = vmul.f32 %v247, %v434
        %v511 = vmul.f32 %v248, %v434
        %v512 = vmul.f32 %v249, %v434
        %v513 = vmul.f32 %v250, %v434
        %v514 = vmul.f32 %v251, %v434
        %v515 = vmul.f32 %v252, %v434
        %v516 = vmul.f32 %v253, %v434
        %v517 = vmul.f32 %v254, %v434
        %v518 = vmul.f32 %v255, %v434
        %v519 = vmul.f32 %v256, %v434
        %v520 = vmul.f32 %v257, %v434
        %v521 = vmul.f32 %v258, %v434
        %v522 = vmul.f32 %v259, %v434
        %v523 = vmul.f32 %v260, %v434
        %v524 = vmul.f32 %v261, %v434
        %v525 = vmul.f32 %v262, %v434
        %v526 = vmul.f32 %v263, %v434
        %v527 = vmul.f32 %v264, %v434
        %v528 = vmul.f32 %v265, %v434
        %v529 = vmul.f32 %v266, %v434
        %v530 = vmul.f32 %v267, %v434
        %v531 = vmul.f32 %v268, %v434
        %v532 = vmul.f32 %v269, %v434
        %v533 = vmul.f32 %v270, %v434
        %v534 = vmul.f32 %v271, %v434
        %v535 = vmul.f32 %v272, %v434
        %v536 = vmul.f32 %v273, %v434
        %v537 = vmul.f32 %v274, %v434
        %v538 = vmul.f32 %v275, %v434
        %v539 = vmul.f32 %v276, %v434
        %v540 = vmul.f32 %v277, %v434
        %v541 = vmul.f32 %v278, %v434
        %v542 = vmul.f32 %v279, %v434
        %v543 = vmul.f32 %v280, %v434
        %v544 = vmul.f32 %v281, %v434
        %v545 = vmul.f32 %v282, %v434
        %v546 = vmul.f32 %v283, %v434
        %v547 = vmul.f32 %v284, %v434
        %v548 = vmul.f32 %v285, %v434
        %v549 = vmul.f32 %v286, %v434
        %v550 = vmul.f32 %v287, %v434
        %v551 = vmul.f32 %v288, %v434
        %v552 = vmul.f32 %v289, %v434
        %v553 = vmul.f32 %v290, %v434
        %v554 = vmul.f32 %v291, %v434
        %v555 = vmul.f32 %v292, %v434
        %v556 = vmul.f32 %v293, %v434
        %v557 = vmul.f32 %v294, %v434
        %v558 = vmul.f32 %v295, %v434
        %v559 = vmul.f32 %v296, %v434
        %v560 = vmul.f32 %v297, %v434
        %v561 = vmul.f32 %v298, %v434
        %v562 = vmul.f32 %v299, %v434
        %v563 = vmul.f32 %v300, %v434
        %v564 = vmul.f32 %v301, %v434
        %v565 = vmul.f32 %v302, %v434
        %v566 = vmul.f32 %v303, %v434
        %v567 = vmul.f32 %v304, %v434
        %v568 = vmul.f32 %v305, %v434
        %v569 = vmul.f32 %v306, %v434
        %v570 = vmul.f32 %v307, %v434
        %v571 = vmul.f32 %v308, %v434
        %v572 = vmul.f32 %v309, %v434
        %v573 = vmul.f32 %v310, %v434
        %v574 = vmul.f32 %v311, %v434
        %v575 = vmul.f32 %v312, %v434
        %v576 = vmul.f32 %v313, %v434
        %v577 = vmul.f32 %v314, %v434
        %v578 = vmul.f32 %v315, %v434
        %v579 = vmul.f32 %v316, %v434
        %v580 = vmul.f32 %v317, %v434
        %v581 = vmul.f32 %v318, %v434
        %v582 = vmul.f32 %v319, %v434
        %v583 = vmul.f32 %v320, %v434
        %v584 = vmul.f32 %v321, %v434
        %v585 = vmul.f32 %v322, %v434
        %v586 = vmul.f32 %v323, %v434
        %v587 = vmul.f32 %v324, %v434
        %v588 = vmul.f32 %v325, %v434
        %v589 = vmul.f32 %v326, %v434
        %v590 = vmul.f32 %v327, %v434
        %v591 = vmul.f32 %v328, %v434
        %v592 = vmul.f32 %v329, %v434
        %v593 = vmul.f32 %v330, %v434
        %v594 = vmul.f32 %v331, %v434
        %v595 = vmul.f32 %v332, %v434
        %v596 = vmul.f32 %v333, %v434
        %v597 = vmul.f32 %v334, %v434
        %v598 = vmul.f32 %v335, %v434
        %v599 = vmul.f32 %v336, %v434
        %v600 = vmul.f32 %v337, %v434
        %v601 = vmul.f32 %v338, %v434
        %v602 = vmul.f32 %v339, %v434
        %v603 = vmul.f32 %v340, %v434
        %v604 = vmul.f32 %v341, %v434
        %v605 = vmul.f32 %v342, %v434
        %v606 = vmul.f32 %v343, %v434
        %v607 = vmul.f32 %v344, %v434
        %v608 = vmul.f32 %v345, %v434
        %v609 = vmul.f32 %v346, %v434
        %v610 = vmul.f32 %v347, %v434
        %v611 = vmul.f32 %v348, %v434
        %v612 = vmul.f32 %v349, %v434
        %v613 = vmul.f32 %v350, %v434
        %v614 = vmul.f32 %v351, %v434
        %v615 = vmul.f32 %v352, %v434
        %v616 = vmul.f32 %v353, %v434
        %v617 = vmul.f32 %v354, %v434
        %v618 = vmul.f32 %v355, %v434
        %v619 = vmul.f32 %v356, %v434
        %v620 = vmul.f32 %v357, %v434
        %v621 = vmul.f32 %v358, %v434
        %v622 = vmul.f32 %v359, %v434
        %v623 = vmul.f32 %v360, %v434
        %v624 = vmul.f32 %v361, %v434
        %v625 = vmul.f32 %v362, %v434
        %v626 = vmul.f32 %v363, %v434
        %v627 = vmul.f32 %v364, %v434
        %v628 = vmul.f32 %v365, %v434
        %v629 = vmul.f32 %v366, %v434
        %v630 = vmul.f32 %v367, %v434
        %v631 = vmul.f32 %v368, %v434
        %v632 = vmul.f32 %v369, %v434
        %v633 = vmul.f32 %v370, %v434
        %v634 = vmul.f32 %v371, %v434
        %v635 = vmul.f32 %v372, %v434
        %v636 = vmul.f32 %v373, %v434
        %v637 = vmul.f32 %v374, %v434
        %v638 = vmul.f32 %v375, %v434
        %v639 = vmul.f32 %v376, %v434
        %v640 = vmul.f32 %v377, %v434
        %v641 = vmul.f32 %v378, %v434
        %v642 = vmul.f32 %v379, %v434
        %v643 = vmul.f32 %v380, %v434
        %v644 = vmul.f32 %v381, %v434
        %v645 = vmul.f32 %v382, %v434
        %v646 = vmul.f32 %v383, %v434
        %v647 = vmul.f32 %v384, %v434
        %v648 = vmul.f32 %v385, %v434
        %v649 = vmul.f32 %v386, %v434
        %v650 = vmul.f32 %v387, %v434
        %v651 = vmul.f32 %v388, %v434
        %v652 = vmul.f32 %v389, %v434
        %v653 = vmul.f32 %v390, %v434
        %v654 = vmul.f32 %v391, %v434
        %v655 = vmul.f32 %v392, %v434
        %v656 = vmul.f32 %v393, %v434
        %v657 = vmul.f32 %v394, %v434
        %v658 = vmul.f32 %v395, %v434
        %v659 = vmul.f32 %v396, %v434
        %v660 = vmul.f32 %v397, %v434
        %v661 = vmul.f32 %v398, %v434
        %v662 = vmul.f32 %v399, %v434
        %v663 = vmul.f32 %v400, %v434
        %v664 = vmul.f32 %v401, %v434
        %v665 = vmul.f32 %v402, %v434
        %v666 = vmul.f32 %v403, %v434
        %v667 = vmul.f32 %v404, %v434
        %v668 = vmul.f32 %v405, %v434
        %v669 = vmul.f32 %v406, %v434
        %v670 = vmul.f32 %v407, %v434
        %v671 = vmul.f32 %v408, %v434
        %v672 = vmul.f32 %v409, %v434
        %v673 = vmul.f32 %v410, %v434
        %v674 = vmul.f32 %v411, %v434
        %v675 = vmul.f32 %v412, %v434
        %v676 = vmul.f32 %v413, %v434
        %v677 = vmul.f32 %v414, %v434
        %v678 = vmul.f32 %v415, %v434
        %v679 = vmul.f32 %v416, %v434
        %v680 = vmul.f32 %v417, %v434
        %v681 = vmul.f32 %v418, %v434
        %v682 = vmul.f32 %v419, %v434
        %v683 = vmul.f32 %v420, %v434
        %v684 = vmul.f32 %v421, %v434
        %v685 = vmul.f32 %v422, %v434
        %v686 = vmul.f32 %v423, %v434
        %v687 = vmul.f32 %v424, %v434
        %v688 = vmul.f32 %v425, %v434
        %v689 = vmul.f32 %v426, %v434
        %v690 = vmul.f32 %v427, %v434
        %v691 = vmul.f32 %v428, %v434
        %vm692 = vcmask 261120
        %v693 = vsel %vm692, %v436, 0.0
        %694 = vadd.xlane.f32.xlu0 %v693
        %v695 = vpop.xlane.xlu0 %694
        %v696 = vsel %vm692, %v437, 0.0
        %697 = vadd.xlane.f32.xlu0 %v696
        %v698 = vpop.xlane.xlu0 %697
        %v699 = vsel %vm692, %v438, 0.0
        %700 = vadd.xlane.f32.xlu0 %v699
        %v701 = vpop.xlane.xlu0 %700
        %v702 = vsel %vm692, %v439, 0.0
        %703 = vadd.xlane.f32.xlu0 %v702
        %v704 = vpop.xlane.xlu0 %703
        %v705 = vsel %vm692, %v440, 0.0
        %706 = vadd.xlane.f32.xlu0 %v705
        %v707 = vpop.xlane.xlu0 %706
        %v708 = vsel %vm692, %v441, 0.0
        %709 = vadd.xlane.f32.xlu0 %v708
        %v710 = vpop.xlane.xlu0 %709
        %v711 = vsel %vm692, %v442, 0.0
        %712 = vadd.xlane.f32.xlu0 %v711
        %v713 = vpop.xlane.xlu0 %712
        %v714 = vsel %vm692, %v443, 0.0
        %715 = vadd.xlane.f32.xlu0 %v714
        %v716 = vpop.xlane.xlu0 %715
        %v717 = vsel %vm692, %v444, 0.0
        %718 = vadd.xlane.f32.xlu0 %v717
        %v719 = vpop.xlane.xlu0 %718
        %v720 = vsel %vm692, %v445, 0.0
        %721 = vadd.xlane.f32.xlu0 %v720
        %v722 = vpop.xlane.xlu0 %721
        %v723 = vsel %vm692, %v446, 0.0
        %724 = vadd.xlane.f32.xlu0 %v723
        %v725 = vpop.xlane.xlu0 %724
        %v726 = vsel %vm692, %v447, 0.0
        %727 = vadd.xlane.f32.xlu0 %v726
        %v728 = vpop.xlane.xlu0 %727
        %v729 = vsel %vm692, %v448, 0.0
        %730 = vadd.xlane.f32.xlu0 %v729
        %v731 = vpop.xlane.xlu0 %730
        %v732 = vsel %vm692, %v449, 0.0
        %733 = vadd.xlane.f32.xlu0 %v732
        %v734 = vpop.xlane.xlu0 %733
        %v735 = vsel %vm692, %v450, 0.0
        %736 = vadd.xlane.f32.xlu0 %v735
        %v737 = vpop.xlane.xlu0 %736
        %v738 = vsel %vm692, %v451, 0.0
        %739 = vadd.xlane.f32.xlu0 %v738
        %v740 = vpop.xlane.xlu0 %739
        %v741 = vsel %vm692, %v452, 0.0
        %742 = vadd.xlane.f32.xlu0 %v741
        %v743 = vpop.xlane.xlu0 %742
        %v744 = vsel %vm692, %v453, 0.0
        %745 = vadd.xlane.f32.xlu0 %v744
        %v746 = vpop.xlane.xlu0 %745
        %v747 = vsel %vm692, %v454, 0.0
        %748 = vadd.xlane.f32.xlu0 %v747
        %v749 = vpop.xlane.xlu0 %748
        %v750 = vsel %vm692, %v455, 0.0
        %751 = vadd.xlane.f32.xlu0 %v750
        %v752 = vpop.xlane.xlu0 %751
        %v753 = vsel %vm692, %v456, 0.0
        %754 = vadd.xlane.f32.xlu0 %v753
        %v755 = vpop.xlane.xlu0 %754
        %v756 = vsel %vm692, %v457, 0.0
        %757 = vadd.xlane.f32.xlu0 %v756
        %v758 = vpop.xlane.xlu0 %757
        %v759 = vsel %vm692, %v458, 0.0
        %760 = vadd.xlane.f32.xlu0 %v759
        %v761 = vpop.xlane.xlu0 %760
        %v762 = vsel %vm692, %v459, 0.0
        %763 = vadd.xlane.f32.xlu0 %v762
        %v764 = vpop.xlane.xlu0 %763
        %v765 = vsel %vm692, %v460, 0.0
        %766 = vadd.xlane.f32.xlu0 %v765
        %v767 = vpop.xlane.xlu0 %766
        %v768 = vsel %vm692, %v461, 0.0
        %769 = vadd.xlane.f32.xlu0 %v768
        %v770 = vpop.xlane.xlu0 %769
        %v771 = vsel %vm692, %v462, 0.0
        %772 = vadd.xlane.f32.xlu0 %v771
        %v773 = vpop.xlane.xlu0 %772
        %v774 = vsel %vm692, %v463, 0.0
        %775 = vadd.xlane.f32.xlu0 %v774
        %v776 = vpop.xlane.xlu0 %775
        %v777 = vsel %vm692, %v464, 0.0
        %778 = vadd.xlane.f32.xlu0 %v777
        %v779 = vpop.xlane.xlu0 %778
        %v780 = vsel %vm692, %v465, 0.0
        %781 = vadd.xlane.f32.xlu0 %v780
        %v782 = vpop.xlane.xlu0 %781
        %v783 = vsel %vm692, %v466, 0.0
        %784 = vadd.xlane.f32.xlu0 %v783
        %v785 = vpop.xlane.xlu0 %784
        %v786 = vsel %vm692, %v467, 0.0
        %787 = vadd.xlane.f32.xlu0 %v786
        %v788 = vpop.xlane.xlu0 %787
        %v789 = vsel %vm692, %v468, 0.0
        %790 = vadd.xlane.f32.xlu0 %v789
        %v791 = vpop.xlane.xlu0 %790
        %v792 = vsel %vm692, %v469, 0.0
        %793 = vadd.xlane.f32.xlu0 %v792
        %v794 = vpop.xlane.xlu0 %793
        %v795 = vsel %vm692, %v470, 0.0
        %796 = vadd.xlane.f32.xlu0 %v795
        %v797 = vpop.xlane.xlu0 %796
        %v798 = vsel %vm692, %v471, 0.0
        %799 = vadd.xlane.f32.xlu0 %v798
        %v800 = vpop.xlane.xlu0 %799
        %v801 = vsel %vm692, %v472, 0.0
        %802 = vadd.xlane.f32.xlu0 %v801
        %v803 = vpop.xlane.xlu0 %802
        %v804 = vsel %vm692, %v473, 0.0
        %805 = vadd.xlane.f32.xlu0 %v804
        %v806 = vpop.xlane.xlu0 %805
        %v807 = vsel %vm692, %v474, 0.0
        %808 = vadd.xlane.f32.xlu0 %v807
        %v809 = vpop.xlane.xlu0 %808
        %v810 = vsel %vm692, %v475, 0.0
        %811 = vadd.xlane.f32.xlu0 %v810
        %v812 = vpop.xlane.xlu0 %811
        %v813 = vsel %vm692, %v476, 0.0
        %814 = vadd.xlane.f32.xlu0 %v813
        %v815 = vpop.xlane.xlu0 %814
        %v816 = vsel %vm692, %v477, 0.0
        %817 = vadd.xlane.f32.xlu0 %v816
        %v818 = vpop.xlane.xlu0 %817
        %v819 = vsel %vm692, %v478, 0.0
        %820 = vadd.xlane.f32.xlu0 %v819
        %v821 = vpop.xlane.xlu0 %820
        %v822 = vsel %vm692, %v479, 0.0
        %823 = vadd.xlane.f32.xlu0 %v822
        %v824 = vpop.xlane.xlu0 %823
        %v825 = vsel %vm692, %v480, 0.0
        %826 = vadd.xlane.f32.xlu0 %v825
        %v827 = vpop.xlane.xlu0 %826
        %v828 = vsel %vm692, %v481, 0.0
        %829 = vadd.xlane.f32.xlu0 %v828
        %v830 = vpop.xlane.xlu0 %829
        %v831 = vsel %vm692, %v482, 0.0
        %832 = vadd.xlane.f32.xlu0 %v831
        %v833 = vpop.xlane.xlu0 %832
        %v834 = vsel %vm692, %v483, 0.0
        %835 = vadd.xlane.f32.xlu0 %v834
        %v836 = vpop.xlane.xlu0 %835
        %v837 = vsel %vm692, %v484, 0.0
        %838 = vadd.xlane.f32.xlu0 %v837
        %v839 = vpop.xlane.xlu0 %838
        %v840 = vsel %vm692, %v485, 0.0
        %841 = vadd.xlane.f32.xlu0 %v840
        %v842 = vpop.xlane.xlu0 %841
        %v843 = vsel %vm692, %v486, 0.0
        %844 = vadd.xlane.f32.xlu0 %v843
        %v845 = vpop.xlane.xlu0 %844
        %v846 = vsel %vm692, %v487, 0.0
        %847 = vadd.xlane.f32.xlu0 %v846
        %v848 = vpop.xlane.xlu0 %847
        %v849 = vsel %vm692, %v488, 0.0
        %850 = vadd.xlane.f32.xlu0 %v849
        %v851 = vpop.xlane.xlu0 %850
        %v852 = vsel %vm692, %v489, 0.0
        %853 = vadd.xlane.f32.xlu0 %v852
        %v854 = vpop.xlane.xlu0 %853
        %v855 = vsel %vm692, %v490, 0.0
        %856 = vadd.xlane.f32.xlu0 %v855
        %v857 = vpop.xlane.xlu0 %856
        %v858 = vsel %vm692, %v491, 0.0
        %859 = vadd.xlane.f32.xlu0 %v858
        %v860 = vpop.xlane.xlu0 %859
        %v861 = vsel %vm692, %v492, 0.0
        %862 = vadd.xlane.f32.xlu0 %v861
        %v863 = vpop.xlane.xlu0 %862
        %v864 = vsel %vm692, %v493, 0.0
        %865 = vadd.xlane.f32.xlu0 %v864
        %v866 = vpop.xlane.xlu0 %865
        %v867 = vsel %vm692, %v494, 0.0
        %868 = vadd.xlane.f32.xlu0 %v867
        %v869 = vpop.xlane.xlu0 %868
        %v870 = vsel %vm692, %v495, 0.0
        %871 = vadd.xlane.f32.xlu0 %v870
        %v872 = vpop.xlane.xlu0 %871
        %v873 = vsel %vm692, %v496, 0.0
        %874 = vadd.xlane.f32.xlu0 %v873
        %v875 = vpop.xlane.xlu0 %874
        %v876 = vsel %vm692, %v497, 0.0
        %877 = vadd.xlane.f32.xlu0 %v876
        %v878 = vpop.xlane.xlu0 %877
        %v879 = vsel %vm692, %v498, 0.0
        %880 = vadd.xlane.f32.xlu0 %v879
        %v881 = vpop.xlane.xlu0 %880
        %v882 = vsel %vm692, %v499, 0.0
        %883 = vadd.xlane.f32.xlu0 %v882
        %v884 = vpop.xlane.xlu0 %883
        %v885 = vsel %vm692, %v500, 0.0
        %886 = vadd.xlane.f32.xlu0 %v885
        %v887 = vpop.xlane.xlu0 %886
        %v888 = vsel %vm692, %v501, 0.0
        %889 = vadd.xlane.f32.xlu0 %v888
        %v890 = vpop.xlane.xlu0 %889
        %v891 = vsel %vm692, %v502, 0.0
        %892 = vadd.xlane.f32.xlu0 %v891
        %v893 = vpop.xlane.xlu0 %892
        %v894 = vsel %vm692, %v503, 0.0
        %895 = vadd.xlane.f32.xlu0 %v894
        %v896 = vpop.xlane.xlu0 %895
        %v897 = vsel %vm692, %v504, 0.0
        %898 = vadd.xlane.f32.xlu0 %v897
        %v899 = vpop.xlane.xlu0 %898
        %v900 = vsel %vm692, %v505, 0.0
        %901 = vadd.xlane.f32.xlu0 %v900
        %v902 = vpop.xlane.xlu0 %901
        %v903 = vsel %vm692, %v506, 0.0
        %904 = vadd.xlane.f32.xlu0 %v903
        %v905 = vpop.xlane.xlu0 %904
        %v906 = vsel %vm692, %v507, 0.0
        %907 = vadd.xlane.f32.xlu0 %v906
        %v908 = vpop.xlane.xlu0 %907
        %v909 = vsel %vm692, %v508, 0.0
        %910 = vadd.xlane.f32.xlu0 %v909
        %v911 = vpop.xlane.xlu0 %910
        %v912 = vsel %vm692, %v509, 0.0
        %913 = vadd.xlane.f32.xlu0 %v912
        %v914 = vpop.xlane.xlu0 %913
        %v915 = vsel %vm692, %v510, 0.0
        %916 = vadd.xlane.f32.xlu0 %v915
        %v917 = vpop.xlane.xlu0 %916
        %v918 = vsel %vm692, %v511, 0.0
        %919 = vadd.xlane.f32.xlu0 %v918
        %v920 = vpop.xlane.xlu0 %919
        %v921 = vsel %vm692, %v512, 0.0
        %922 = vadd.xlane.f32.xlu0 %v921
        %v923 = vpop.xlane.xlu0 %922
        %v924 = vsel %vm692, %v513, 0.0
        %925 = vadd.xlane.f32.xlu0 %v924
        %v926 = vpop.xlane.xlu0 %925
        %v927 = vsel %vm692, %v514, 0.0
        %928 = vadd.xlane.f32.xlu0 %v927
        %v929 = vpop.xlane.xlu0 %928
        %v930 = vsel %vm692, %v515, 0.0
        %931 = vadd.xlane.f32.xlu0 %v930
        %v932 = vpop.xlane.xlu0 %931
        %v933 = vsel %vm692, %v516, 0.0
        %934 = vadd.xlane.f32.xlu0 %v933
        %v935 = vpop.xlane.xlu0 %934
        %v936 = vsel %vm692, %v517, 0.0
        %937 = vadd.xlane.f32.xlu0 %v936
        %v938 = vpop.xlane.xlu0 %937
        %v939 = vsel %vm692, %v518, 0.0
        %940 = vadd.xlane.f32.xlu0 %v939
        %v941 = vpop.xlane.xlu0 %940
        %v942 = vsel %vm692, %v519, 0.0
        %943 = vadd.xlane.f32.xlu0 %v942
        %v944 = vpop.xlane.xlu0 %943
        %v945 = vsel %vm692, %v520, 0.0
        %946 = vadd.xlane.f32.xlu0 %v945
        %v947 = vpop.xlane.xlu0 %946
        %v948 = vsel %vm692, %v521, 0.0
        %949 = vadd.xlane.f32.xlu0 %v948
        %v950 = vpop.xlane.xlu0 %949
        %v951 = vsel %vm692, %v522, 0.0
        %952 = vadd.xlane.f32.xlu0 %v951
        %v953 = vpop.xlane.xlu0 %952
        %v954 = vsel %vm692, %v523, 0.0
        %955 = vadd.xlane.f32.xlu0 %v954
        %v956 = vpop.xlane.xlu0 %955
        %v957 = vsel %vm692, %v524, 0.0
        %958 = vadd.xlane.f32.xlu0 %v957
        %v959 = vpop.xlane.xlu0 %958
        %v960 = vsel %vm692, %v525, 0.0
        %961 = vadd.xlane.f32.xlu0 %v960
        %v962 = vpop.xlane.xlu0 %961
        %v963 = vsel %vm692, %v526, 0.0
        %964 = vadd.xlane.f32.xlu0 %v963
        %v965 = vpop.xlane.xlu0 %964
        %v966 = vsel %vm692, %v527, 0.0
        %967 = vadd.xlane.f32.xlu0 %v966
        %v968 = vpop.xlane.xlu0 %967
        %v969 = vsel %vm692, %v528, 0.0
        %970 = vadd.xlane.f32.xlu0 %v969
        %v971 = vpop.xlane.xlu0 %970
        %v972 = vsel %vm692, %v529, 0.0
        %973 = vadd.xlane.f32.xlu0 %v972
        %v974 = vpop.xlane.xlu0 %973
        %v975 = vsel %vm692, %v530, 0.0
        %976 = vadd.xlane.f32.xlu0 %v975
        %v977 = vpop.xlane.xlu0 %976
        %v978 = vsel %vm692, %v531, 0.0
        %979 = vadd.xlane.f32.xlu0 %v978
        %v980 = vpop.xlane.xlu0 %979
        %v981 = vsel %vm692, %v532, 0.0
        %982 = vadd.xlane.f32.xlu0 %v981
        %v983 = vpop.xlane.xlu0 %982
        %v984 = vsel %vm692, %v533, 0.0
        %985 = vadd.xlane.f32.xlu0 %v984
        %v986 = vpop.xlane.xlu0 %985
        %v987 = vsel %vm692, %v534, 0.0
        %988 = vadd.xlane.f32.xlu0 %v987
        %v989 = vpop.xlane.xlu0 %988
        %v990 = vsel %vm692, %v535, 0.0
        %991 = vadd.xlane.f32.xlu0 %v990
        %v992 = vpop.xlane.xlu0 %991
        %v993 = vsel %vm692, %v536, 0.0
        %994 = vadd.xlane.f32.xlu0 %v993
        %v995 = vpop.xlane.xlu0 %994
        %v996 = vsel %vm692, %v537, 0.0
        %997 = vadd.xlane.f32.xlu0 %v996
        %v998 = vpop.xlane.xlu0 %997
        %v999 = vsel %vm692, %v538, 0.0
        %1000 = vadd.xlane.f32.xlu0 %v999
        %v1001 = vpop.xlane.xlu0 %1000
        %v1002 = vsel %vm692, %v539, 0.0
        %1003 = vadd.xlane.f32.xlu0 %v1002
        %v1004 = vpop.xlane.xlu0 %1003
        %v1005 = vsel %vm692, %v540, 0.0
        %1006 = vadd.xlane.f32.xlu0 %v1005
        %v1007 = vpop.xlane.xlu0 %1006
        %v1008 = vsel %vm692, %v541, 0.0
        %1009 = vadd.xlane.f32.xlu0 %v1008
        %v1010 = vpop.xlane.xlu0 %1009
        %v1011 = vsel %vm692, %v542, 0.0
        %1012 = vadd.xlane.f32.xlu0 %v1011
        %v1013 = vpop.xlane.xlu0 %1012
        %v1014 = vsel %vm692, %v543, 0.0
        %1015 = vadd.xlane.f32.xlu0 %v1014
        %v1016 = vpop.xlane.xlu0 %1015
        %v1017 = vsel %vm692, %v544, 0.0
        %1018 = vadd.xlane.f32.xlu0 %v1017
        %v1019 = vpop.xlane.xlu0 %1018
        %v1020 = vsel %vm692, %v545, 0.0
        %1021 = vadd.xlane.f32.xlu0 %v1020
        %v1022 = vpop.xlane.xlu0 %1021
        %v1023 = vsel %vm692, %v546, 0.0
        %1024 = vadd.xlane.f32.xlu0 %v1023
        %v1025 = vpop.xlane.xlu0 %1024
        %v1026 = vsel %vm692, %v547, 0.0
        %1027 = vadd.xlane.f32.xlu0 %v1026
        %v1028 = vpop.xlane.xlu0 %1027
        %v1029 = vsel %vm692, %v548, 0.0
        %1030 = vadd.xlane.f32.xlu0 %v1029
        %v1031 = vpop.xlane.xlu0 %1030
        %v1032 = vsel %vm692, %v549, 0.0
        %1033 = vadd.xlane.f32.xlu0 %v1032
        %v1034 = vpop.xlane.xlu0 %1033
        %v1035 = vsel %vm692, %v550, 0.0
        %1036 = vadd.xlane.f32.xlu0 %v1035
        %v1037 = vpop.xlane.xlu0 %1036
        %v1038 = vsel %vm692, %v551, 0.0
        %1039 = vadd.xlane.f32.xlu0 %v1038
        %v1040 = vpop.xlane.xlu0 %1039
        %v1041 = vsel %vm692, %v552, 0.0
        %1042 = vadd.xlane.f32.xlu0 %v1041
        %v1043 = vpop.xlane.xlu0 %1042
        %v1044 = vsel %vm692, %v553, 0.0
        %1045 = vadd.xlane.f32.xlu0 %v1044
        %v1046 = vpop.xlane.xlu0 %1045
        %v1047 = vsel %vm692, %v554, 0.0
        %1048 = vadd.xlane.f32.xlu0 %v1047
        %v1049 = vpop.xlane.xlu0 %1048
        %v1050 = vsel %vm692, %v555, 0.0
        %1051 = vadd.xlane.f32.xlu0 %v1050
        %v1052 = vpop.xlane.xlu0 %1051
        %v1053 = vsel %vm692, %v556, 0.0
        %1054 = vadd.xlane.f32.xlu0 %v1053
        %v1055 = vpop.xlane.xlu0 %1054
        %v1056 = vsel %vm692, %v557, 0.0
        %1057 = vadd.xlane.f32.xlu0 %v1056
        %v1058 = vpop.xlane.xlu0 %1057
        %v1059 = vsel %vm692, %v558, 0.0
        %1060 = vadd.xlane.f32.xlu0 %v1059
        %v1061 = vpop.xlane.xlu0 %1060
        %v1062 = vsel %vm692, %v559, 0.0
        %1063 = vadd.xlane.f32.xlu0 %v1062
        %v1064 = vpop.xlane.xlu0 %1063
        %v1065 = vsel %vm692, %v560, 0.0
        %1066 = vadd.xlane.f32.xlu0 %v1065
        %v1067 = vpop.xlane.xlu0 %1066
        %v1068 = vsel %vm692, %v561, 0.0
        %1069 = vadd.xlane.f32.xlu0 %v1068
        %v1070 = vpop.xlane.xlu0 %1069
        %v1071 = vsel %vm692, %v562, 0.0
        %1072 = vadd.xlane.f32.xlu0 %v1071
        %v1073 = vpop.xlane.xlu0 %1072
        %v1074 = vsel %vm692, %v563, 0.0
        %1075 = vadd.xlane.f32.xlu0 %v1074
        %v1076 = vpop.xlane.xlu0 %1075
        %v1077 = vsel %vm692, %v564, 0.0
        %1078 = vadd.xlane.f32.xlu0 %v1077
        %v1079 = vpop.xlane.xlu0 %1078
        %v1080 = vsel %vm692, %v565, 0.0
        %1081 = vadd.xlane.f32.xlu0 %v1080
        %v1082 = vpop.xlane.xlu0 %1081
        %v1083 = vsel %vm692, %v566, 0.0
        %1084 = vadd.xlane.f32.xlu0 %v1083
        %v1085 = vpop.xlane.xlu0 %1084
        %v1086 = vsel %vm692, %v567, 0.0
        %1087 = vadd.xlane.f32.xlu0 %v1086
        %v1088 = vpop.xlane.xlu0 %1087
        %v1089 = vsel %vm692, %v568, 0.0
        %1090 = vadd.xlane.f32.xlu0 %v1089
        %v1091 = vpop.xlane.xlu0 %1090
        %v1092 = vsel %vm692, %v569, 0.0
        %1093 = vadd.xlane.f32.xlu0 %v1092
        %v1094 = vpop.xlane.xlu0 %1093
        %v1095 = vsel %vm692, %v570, 0.0
        %1096 = vadd.xlane.f32.xlu0 %v1095
        %v1097 = vpop.xlane.xlu0 %1096
        %v1098 = vsel %vm692, %v571, 0.0
        %1099 = vadd.xlane.f32.xlu0 %v1098
        %v1100 = vpop.xlane.xlu0 %1099
        %v1101 = vsel %vm692, %v572, 0.0
        %1102 = vadd.xlane.f32.xlu0 %v1101
        %v1103 = vpop.xlane.xlu0 %1102
        %v1104 = vsel %vm692, %v573, 0.0
        %1105 = vadd.xlane.f32.xlu0 %v1104
        %v1106 = vpop.xlane.xlu0 %1105
        %v1107 = vsel %vm692, %v574, 0.0
        %1108 = vadd.xlane.f32.xlu0 %v1107
        %v1109 = vpop.xlane.xlu0 %1108
        %v1110 = vsel %vm692, %v575, 0.0
        %1111 = vadd.xlane.f32.xlu0 %v1110
        %v1112 = vpop.xlane.xlu0 %1111
        %v1113 = vsel %vm692, %v576, 0.0
        %1114 = vadd.xlane.f32.xlu0 %v1113
        %v1115 = vpop.xlane.xlu0 %1114
        %v1116 = vsel %vm692, %v577, 0.0
        %1117 = vadd.xlane.f32.xlu0 %v1116
        %v1118 = vpop.xlane.xlu0 %1117
        %v1119 = vsel %vm692, %v578, 0.0
        %1120 = vadd.xlane.f32.xlu0 %v1119
        %v1121 = vpop.xlane.xlu0 %1120
        %v1122 = vsel %vm692, %v579, 0.0
        %1123 = vadd.xlane.f32.xlu0 %v1122
        %v1124 = vpop.xlane.xlu0 %1123
        %v1125 = vsel %vm692, %v580, 0.0
        %1126 = vadd.xlane.f32.xlu0 %v1125
        %v1127 = vpop.xlane.xlu0 %1126
        %v1128 = vsel %vm692, %v581, 0.0
        %1129 = vadd.xlane.f32.xlu0 %v1128
        %v1130 = vpop.xlane.xlu0 %1129
        %v1131 = vsel %vm692, %v582, 0.0
        %1132 = vadd.xlane.f32.xlu0 %v1131
        %v1133 = vpop.xlane.xlu0 %1132
        %v1134 = vsel %vm692, %v583, 0.0
        %1135 = vadd.xlane.f32.xlu0 %v1134
        %v1136 = vpop.xlane.xlu0 %1135
        %v1137 = vsel %vm692, %v584, 0.0
        %1138 = vadd.xlane.f32.xlu0 %v1137
        %v1139 = vpop.xlane.xlu0 %1138
        %v1140 = vsel %vm692, %v585, 0.0
        %1141 = vadd.xlane.f32.xlu0 %v1140
        %v1142 = vpop.xlane.xlu0 %1141
        %v1143 = vsel %vm692, %v586, 0.0
        %1144 = vadd.xlane.f32.xlu0 %v1143
        %v1145 = vpop.xlane.xlu0 %1144
        %v1146 = vsel %vm692, %v587, 0.0
        %1147 = vadd.xlane.f32.xlu0 %v1146
        %v1148 = vpop.xlane.xlu0 %1147
        %v1149 = vsel %vm692, %v588, 0.0
        %1150 = vadd.xlane.f32.xlu0 %v1149
        %v1151 = vpop.xlane.xlu0 %1150
        %v1152 = vsel %vm692, %v589, 0.0
        %1153 = vadd.xlane.f32.xlu0 %v1152
        %v1154 = vpop.xlane.xlu0 %1153
        %v1155 = vsel %vm692, %v590, 0.0
        %1156 = vadd.xlane.f32.xlu0 %v1155
        %v1157 = vpop.xlane.xlu0 %1156
        %v1158 = vsel %vm692, %v591, 0.0
        %1159 = vadd.xlane.f32.xlu0 %v1158
        %v1160 = vpop.xlane.xlu0 %1159
        %v1161 = vsel %vm692, %v592, 0.0
        %1162 = vadd.xlane.f32.xlu0 %v1161
        %v1163 = vpop.xlane.xlu0 %1162
        %v1164 = vsel %vm692, %v593, 0.0
        %1165 = vadd.xlane.f32.xlu0 %v1164
        %v1166 = vpop.xlane.xlu0 %1165
        %v1167 = vsel %vm692, %v594, 0.0
        %1168 = vadd.xlane.f32.xlu0 %v1167
        %v1169 = vpop.xlane.xlu0 %1168
        %v1170 = vsel %vm692, %v595, 0.0
        %1171 = vadd.xlane.f32.xlu0 %v1170
        %v1172 = vpop.xlane.xlu0 %1171
        %v1173 = vsel %vm692, %v596, 0.0
        %1174 = vadd.xlane.f32.xlu0 %v1173
        %v1175 = vpop.xlane.xlu0 %1174
        %v1176 = vsel %vm692, %v597, 0.0
        %1177 = vadd.xlane.f32.xlu0 %v1176
        %v1178 = vpop.xlane.xlu0 %1177
        %v1179 = vsel %vm692, %v598, 0.0
        %1180 = vadd.xlane.f32.xlu0 %v1179
        %v1181 = vpop.xlane.xlu0 %1180
        %v1182 = vsel %vm692, %v599, 0.0
        %1183 = vadd.xlane.f32.xlu0 %v1182
        %v1184 = vpop.xlane.xlu0 %1183
        %v1185 = vsel %vm692, %v600, 0.0
        %1186 = vadd.xlane.f32.xlu0 %v1185
        %v1187 = vpop.xlane.xlu0 %1186
        %v1188 = vsel %vm692, %v601, 0.0
        %1189 = vadd.xlane.f32.xlu0 %v1188
        %v1190 = vpop.xlane.xlu0 %1189
        %v1191 = vsel %vm692, %v602, 0.0
        %1192 = vadd.xlane.f32.xlu0 %v1191
        %v1193 = vpop.xlane.xlu0 %1192
        %v1194 = vsel %vm692, %v603, 0.0
        %1195 = vadd.xlane.f32.xlu0 %v1194
        %v1196 = vpop.xlane.xlu0 %1195
        %v1197 = vsel %vm692, %v604, 0.0
        %1198 = vadd.xlane.f32.xlu0 %v1197
        %v1199 = vpop.xlane.xlu0 %1198
        %v1200 = vsel %vm692, %v605, 0.0
        %1201 = vadd.xlane.f32.xlu0 %v1200
        %v1202 = vpop.xlane.xlu0 %1201
        %v1203 = vsel %vm692, %v606, 0.0
        %1204 = vadd.xlane.f32.xlu0 %v1203
        %v1205 = vpop.xlane.xlu0 %1204
        %v1206 = vsel %vm692, %v607, 0.0
        %1207 = vadd.xlane.f32.xlu0 %v1206
        %v1208 = vpop.xlane.xlu0 %1207
        %v1209 = vsel %vm692, %v608, 0.0
        %1210 = vadd.xlane.f32.xlu0 %v1209
        %v1211 = vpop.xlane.xlu0 %1210
        %v1212 = vsel %vm692, %v609, 0.0
        %1213 = vadd.xlane.f32.xlu0 %v1212
        %v1214 = vpop.xlane.xlu0 %1213
        %v1215 = vsel %vm692, %v610, 0.0
        %1216 = vadd.xlane.f32.xlu0 %v1215
        %v1217 = vpop.xlane.xlu0 %1216
        %v1218 = vsel %vm692, %v611, 0.0
        %1219 = vadd.xlane.f32.xlu0 %v1218
        %v1220 = vpop.xlane.xlu0 %1219
        %v1221 = vsel %vm692, %v612, 0.0
        %1222 = vadd.xlane.f32.xlu0 %v1221
        %v1223 = vpop.xlane.xlu0 %1222
        %v1224 = vsel %vm692, %v613, 0.0
        %1225 = vadd.xlane.f32.xlu0 %v1224
        %v1226 = vpop.xlane.xlu0 %1225
        %v1227 = vsel %vm692, %v614, 0.0
        %1228 = vadd.xlane.f32.xlu0 %v1227
        %v1229 = vpop.xlane.xlu0 %1228
        %v1230 = vsel %vm692, %v615, 0.0
        %1231 = vadd.xlane.f32.xlu0 %v1230
        %v1232 = vpop.xlane.xlu0 %1231
        %v1233 = vsel %vm692, %v616, 0.0
        %1234 = vadd.xlane.f32.xlu0 %v1233
        %v1235 = vpop.xlane.xlu0 %1234
        %v1236 = vsel %vm692, %v617, 0.0
        %1237 = vadd.xlane.f32.xlu0 %v1236
        %v1238 = vpop.xlane.xlu0 %1237
        %v1239 = vsel %vm692, %v618, 0.0
        %1240 = vadd.xlane.f32.xlu0 %v1239
        %v1241 = vpop.xlane.xlu0 %1240
        %v1242 = vsel %vm692, %v619, 0.0
        %1243 = vadd.xlane.f32.xlu0 %v1242
        %v1244 = vpop.xlane.xlu0 %1243
        %v1245 = vsel %vm692, %v620, 0.0
        %1246 = vadd.xlane.f32.xlu0 %v1245
        %v1247 = vpop.xlane.xlu0 %1246
        %v1248 = vsel %vm692, %v621, 0.0
        %1249 = vadd.xlane.f32.xlu0 %v1248
        %v1250 = vpop.xlane.xlu0 %1249
        %v1251 = vsel %vm692, %v622, 0.0
        %1252 = vadd.xlane.f32.xlu0 %v1251
        %v1253 = vpop.xlane.xlu0 %1252
        %v1254 = vsel %vm692, %v623, 0.0
        %1255 = vadd.xlane.f32.xlu0 %v1254
        %v1256 = vpop.xlane.xlu0 %1255
        %v1257 = vsel %vm692, %v624, 0.0
        %1258 = vadd.xlane.f32.xlu0 %v1257
        %v1259 = vpop.xlane.xlu0 %1258
        %v1260 = vsel %vm692, %v625, 0.0
        %1261 = vadd.xlane.f32.xlu0 %v1260
        %v1262 = vpop.xlane.xlu0 %1261
        %v1263 = vsel %vm692, %v626, 0.0
        %1264 = vadd.xlane.f32.xlu0 %v1263
        %v1265 = vpop.xlane.xlu0 %1264
        %v1266 = vsel %vm692, %v627, 0.0
        %1267 = vadd.xlane.f32.xlu0 %v1266
        %v1268 = vpop.xlane.xlu0 %1267
        %v1269 = vsel %vm692, %v628, 0.0
        %1270 = vadd.xlane.f32.xlu0 %v1269
        %v1271 = vpop.xlane.xlu0 %1270
        %v1272 = vsel %vm692, %v629, 0.0
        %1273 = vadd.xlane.f32.xlu0 %v1272
        %v1274 = vpop.xlane.xlu0 %1273
        %v1275 = vsel %vm692, %v630, 0.0
        %1276 = vadd.xlane.f32.xlu0 %v1275
        %v1277 = vpop.xlane.xlu0 %1276
        %v1278 = vsel %vm692, %v631, 0.0
        %1279 = vadd.xlane.f32.xlu0 %v1278
        %v1280 = vpop.xlane.xlu0 %1279
        %v1281 = vsel %vm692, %v632, 0.0
        %1282 = vadd.xlane.f32.xlu0 %v1281
        %v1283 = vpop.xlane.xlu0 %1282
        %v1284 = vsel %vm692, %v633, 0.0
        %1285 = vadd.xlane.f32.xlu0 %v1284
        %v1286 = vpop.xlane.xlu0 %1285
        %v1287 = vsel %vm692, %v634, 0.0
        %1288 = vadd.xlane.f32.xlu0 %v1287
        %v1289 = vpop.xlane.xlu0 %1288
        %v1290 = vsel %vm692, %v635, 0.0
        %1291 = vadd.xlane.f32.xlu0 %v1290
        %v1292 = vpop.xlane.xlu0 %1291
        %v1293 = vsel %vm692, %v636, 0.0
        %1294 = vadd.xlane.f32.xlu0 %v1293
        %v1295 = vpop.xlane.xlu0 %1294
        %v1296 = vsel %vm692, %v637, 0.0
        %1297 = vadd.xlane.f32.xlu0 %v1296
        %v1298 = vpop.xlane.xlu0 %1297
        %v1299 = vsel %vm692, %v638, 0.0
        %1300 = vadd.xlane.f32.xlu0 %v1299
        %v1301 = vpop.xlane.xlu0 %1300
        %v1302 = vsel %vm692, %v639, 0.0
        %1303 = vadd.xlane.f32.xlu0 %v1302
        %v1304 = vpop.xlane.xlu0 %1303
        %v1305 = vsel %vm692, %v640, 0.0
        %1306 = vadd.xlane.f32.xlu0 %v1305
        %v1307 = vpop.xlane.xlu0 %1306
        %v1308 = vsel %vm692, %v641, 0.0
        %1309 = vadd.xlane.f32.xlu0 %v1308
        %v1310 = vpop.xlane.xlu0 %1309
        %v1311 = vsel %vm692, %v642, 0.0
        %1312 = vadd.xlane.f32.xlu0 %v1311
        %v1313 = vpop.xlane.xlu0 %1312
        %v1314 = vsel %vm692, %v643, 0.0
        %1315 = vadd.xlane.f32.xlu0 %v1314
        %v1316 = vpop.xlane.xlu0 %1315
        %v1317 = vsel %vm692, %v644, 0.0
        %1318 = vadd.xlane.f32.xlu0 %v1317
        %v1319 = vpop.xlane.xlu0 %1318
        %v1320 = vsel %vm692, %v645, 0.0
        %1321 = vadd.xlane.f32.xlu0 %v1320
        %v1322 = vpop.xlane.xlu0 %1321
        %v1323 = vsel %vm692, %v646, 0.0
        %1324 = vadd.xlane.f32.xlu0 %v1323
        %v1325 = vpop.xlane.xlu0 %1324
        %v1326 = vsel %vm692, %v647, 0.0
        %1327 = vadd.xlane.f32.xlu0 %v1326
        %v1328 = vpop.xlane.xlu0 %1327
        %v1329 = vsel %vm692, %v648, 0.0
        %1330 = vadd.xlane.f32.xlu0 %v1329
        %v1331 = vpop.xlane.xlu0 %1330
        %v1332 = vsel %vm692, %v649, 0.0
        %1333 = vadd.xlane.f32.xlu0 %v1332
        %v1334 = vpop.xlane.xlu0 %1333
        %v1335 = vsel %vm692, %v650, 0.0
        %1336 = vadd.xlane.f32.xlu0 %v1335
        %v1337 = vpop.xlane.xlu0 %1336
        %v1338 = vsel %vm692, %v651, 0.0
        %1339 = vadd.xlane.f32.xlu0 %v1338
        %v1340 = vpop.xlane.xlu0 %1339
        %v1341 = vsel %vm692, %v652, 0.0
        %1342 = vadd.xlane.f32.xlu0 %v1341
        %v1343 = vpop.xlane.xlu0 %1342
        %v1344 = vsel %vm692, %v653, 0.0
        %1345 = vadd.xlane.f32.xlu0 %v1344
        %v1346 = vpop.xlane.xlu0 %1345
        %v1347 = vsel %vm692, %v654, 0.0
        %1348 = vadd.xlane.f32.xlu0 %v1347
        %v1349 = vpop.xlane.xlu0 %1348
        %v1350 = vsel %vm692, %v655, 0.0
        %1351 = vadd.xlane.f32.xlu0 %v1350
        %v1352 = vpop.xlane.xlu0 %1351
        %v1353 = vsel %vm692, %v656, 0.0
        %1354 = vadd.xlane.f32.xlu0 %v1353
        %v1355 = vpop.xlane.xlu0 %1354
        %v1356 = vsel %vm692, %v657, 0.0
        %1357 = vadd.xlane.f32.xlu0 %v1356
        %v1358 = vpop.xlane.xlu0 %1357
        %v1359 = vsel %vm692, %v658, 0.0
        %1360 = vadd.xlane.f32.xlu0 %v1359
        %v1361 = vpop.xlane.xlu0 %1360
        %v1362 = vsel %vm692, %v659, 0.0
        %1363 = vadd.xlane.f32.xlu0 %v1362
        %v1364 = vpop.xlane.xlu0 %1363
        %v1365 = vsel %vm692, %v660, 0.0
        %1366 = vadd.xlane.f32.xlu0 %v1365
        %v1367 = vpop.xlane.xlu0 %1366
        %v1368 = vsel %vm692, %v661, 0.0
        %1369 = vadd.xlane.f32.xlu0 %v1368
        %v1370 = vpop.xlane.xlu0 %1369
        %v1371 = vsel %vm692, %v662, 0.0
        %1372 = vadd.xlane.f32.xlu0 %v1371
        %v1373 = vpop.xlane.xlu0 %1372
        %v1374 = vsel %vm692, %v663, 0.0
        %1375 = vadd.xlane.f32.xlu0 %v1374
        %v1376 = vpop.xlane.xlu0 %1375
        %v1377 = vsel %vm692, %v664, 0.0
        %1378 = vadd.xlane.f32.xlu0 %v1377
        %v1379 = vpop.xlane.xlu0 %1378
        %v1380 = vsel %vm692, %v665, 0.0
        %1381 = vadd.xlane.f32.xlu0 %v1380
        %v1382 = vpop.xlane.xlu0 %1381
        %v1383 = vsel %vm692, %v666, 0.0
        %1384 = vadd.xlane.f32.xlu0 %v1383
        %v1385 = vpop.xlane.xlu0 %1384
        %v1386 = vsel %vm692, %v667, 0.0
        %1387 = vadd.xlane.f32.xlu0 %v1386
        %v1388 = vpop.xlane.xlu0 %1387
        %v1389 = vsel %vm692, %v668, 0.0
        %1390 = vadd.xlane.f32.xlu0 %v1389
        %v1391 = vpop.xlane.xlu0 %1390
        %v1392 = vsel %vm692, %v669, 0.0
        %1393 = vadd.xlane.f32.xlu0 %v1392
        %v1394 = vpop.xlane.xlu0 %1393
        %v1395 = vsel %vm692, %v670, 0.0
        %1396 = vadd.xlane.f32.xlu0 %v1395
        %v1397 = vpop.xlane.xlu0 %1396
        %v1398 = vsel %vm692, %v671, 0.0
        %1399 = vadd.xlane.f32.xlu0 %v1398
        %v1400 = vpop.xlane.xlu0 %1399
        %v1401 = vsel %vm692, %v672, 0.0
        %1402 = vadd.xlane.f32.xlu0 %v1401
        %v1403 = vpop.xlane.xlu0 %1402
        %v1404 = vsel %vm692, %v673, 0.0
        %1405 = vadd.xlane.f32.xlu0 %v1404
        %v1406 = vpop.xlane.xlu0 %1405
        %v1407 = vsel %vm692, %v674, 0.0
        %1408 = vadd.xlane.f32.xlu0 %v1407
        %v1409 = vpop.xlane.xlu0 %1408
        %v1410 = vsel %vm692, %v675, 0.0
        %1411 = vadd.xlane.f32.xlu0 %v1410
        %v1412 = vpop.xlane.xlu0 %1411
        %v1413 = vsel %vm692, %v676, 0.0
        %1414 = vadd.xlane.f32.xlu0 %v1413
        %v1415 = vpop.xlane.xlu0 %1414
        %v1416 = vsel %vm692, %v677, 0.0
        %1417 = vadd.xlane.f32.xlu0 %v1416
        %v1418 = vpop.xlane.xlu0 %1417
        %v1419 = vsel %vm692, %v678, 0.0
        %1420 = vadd.xlane.f32.xlu0 %v1419
        %v1421 = vpop.xlane.xlu0 %1420
        %v1422 = vsel %vm692, %v679, 0.0
        %1423 = vadd.xlane.f32.xlu0 %v1422
        %v1424 = vpop.xlane.xlu0 %1423
        %v1425 = vsel %vm692, %v680, 0.0
        %1426 = vadd.xlane.f32.xlu0 %v1425
        %v1427 = vpop.xlane.xlu0 %1426
        %v1428 = vsel %vm692, %v681, 0.0
        %1429 = vadd.xlane.f32.xlu0 %v1428
        %v1430 = vpop.xlane.xlu0 %1429
        %v1431 = vsel %vm692, %v682, 0.0
        %1432 = vadd.xlane.f32.xlu0 %v1431
        %v1433 = vpop.xlane.xlu0 %1432
        %v1434 = vsel %vm692, %v683, 0.0
        %1435 = vadd.xlane.f32.xlu0 %v1434
        %v1436 = vpop.xlane.xlu0 %1435
        %v1437 = vsel %vm692, %v684, 0.0
        %1438 = vadd.xlane.f32.xlu0 %v1437
        %v1439 = vpop.xlane.xlu0 %1438
        %v1440 = vsel %vm692, %v685, 0.0
        %1441 = vadd.xlane.f32.xlu0 %v1440
        %v1442 = vpop.xlane.xlu0 %1441
        %v1443 = vsel %vm692, %v686, 0.0
        %1444 = vadd.xlane.f32.xlu0 %v1443
        %v1445 = vpop.xlane.xlu0 %1444
        %v1446 = vsel %vm692, %v687, 0.0
        %1447 = vadd.xlane.f32.xlu0 %v1446
        %v1448 = vpop.xlane.xlu0 %1447
        %v1449 = vsel %vm692, %v688, 0.0
        %1450 = vadd.xlane.f32.xlu0 %v1449
        %v1451 = vpop.xlane.xlu0 %1450
        %v1452 = vsel %vm692, %v689, 0.0
        %1453 = vadd.xlane.f32.xlu0 %v1452
        %v1454 = vpop.xlane.xlu0 %1453
        %v1455 = vsel %vm692, %v690, 0.0
        %1456 = vadd.xlane.f32.xlu0 %v1455
        %v1457 = vpop.xlane.xlu0 %1456
        %v1458 = vsel %vm692, %v691, 0.0
        %1459 = vadd.xlane.f32.xlu0 %v1458
        %v1460 = vpop.xlane.xlu0 %1459
        %1461 = vxpose.xlu0.b32.start [1/16] %v695, 128
        %1462 = vxpose.xlu0.b32.cont [2/16] %v698, 128
        %1463 = vxpose.xlu0.b32.cont [3/16] %v701, 128
        %1464 = vxpose.xlu0.b32.cont [4/16] %v704, 128
        %1465 = vxpose.xlu0.b32.cont [5/16] %v707, 128
        %1466 = vxpose.xlu0.b32.cont [6/16] %v710, 128
        %1467 = vxpose.xlu0.b32.cont [7/16] %v713, 128
        %1468 = vxpose.xlu0.b32.cont [8/16] %v716, 128
        %1469 = vxpose.xlu0.b32.cont [9/16] %v719, 128
        %1470 = vxpose.xlu0.b32.cont [10/16] %v722, 128
        %1471 = vxpose.xlu0.b32.cont [11/16] %v725, 128
        %1472 = vxpose.xlu0.b32.cont [12/16] %v728, 128
        %1473 = vxpose.xlu0.b32.cont [13/16] %v731, 128
        %1474 = vxpose.xlu0.b32.cont [14/16] %v734, 128
        %1475 = vxpose.xlu0.b32.cont [15/16] %v737, 128
        %1476 = vxpose.xlu0.b32.end [16/16] %v740, 128
        %v1477 = vpop.trf.xlu0
        %v1478 = vpop.trf.xlu0
        %v1479 = vpop.trf.xlu0
        %v1480 = vpop.trf.xlu0
        %v1481 = vpop.trf.xlu0
        %v1482 = vpop.trf.xlu0
        %v1483 = vpop.trf.xlu0
        %v1484 = vpop.trf.xlu0
        %v1485 = vpop.trf.xlu0
        %v1486 = vpop.trf.xlu0
        %v1487 = vpop.trf.xlu0
        %v1488 = vpop.trf.xlu0
        %v1489 = vpop.trf.xlu0
        %v1490 = vpop.trf.xlu0
        %v1491 = vpop.trf.xlu0
        %v1492 = vpop.trf.xlu0
        %1493 = vxpose.xlu0.b32.start [1/16] %v743, 128
        %1494 = vxpose.xlu0.b32.cont [2/16] %v746, 128
        %1495 = vxpose.xlu0.b32.cont [3/16] %v749, 128
        %1496 = vxpose.xlu0.b32.cont [4/16] %v752, 128
        %1497 = vxpose.xlu0.b32.cont [5/16] %v755, 128
        %1498 = vxpose.xlu0.b32.cont [6/16] %v758, 128
        %1499 = vxpose.xlu0.b32.cont [7/16] %v761, 128
        %1500 = vxpose.xlu0.b32.cont [8/16] %v764, 128
        %1501 = vxpose.xlu0.b32.cont [9/16] %v767, 128
        %1502 = vxpose.xlu0.b32.cont [10/16] %v770, 128
        %1503 = vxpose.xlu0.b32.cont [11/16] %v773, 128
        %1504 = vxpose.xlu0.b32.cont [12/16] %v776, 128
        %1505 = vxpose.xlu0.b32.cont [13/16] %v779, 128
        %1506 = vxpose.xlu0.b32.cont [14/16] %v782, 128
        %1507 = vxpose.xlu0.b32.cont [15/16] %v785, 128
        %1508 = vxpose.xlu0.b32.end [16/16] %v788, 128
        %v1509 = vpop.trf.xlu0
        %v1510 = vpop.trf.xlu0
        %v1511 = vpop.trf.xlu0
        %v1512 = vpop.trf.xlu0
        %v1513 = vpop.trf.xlu0
        %v1514 = vpop.trf.xlu0
        %v1515 = vpop.trf.xlu0
        %v1516 = vpop.trf.xlu0
        %v1517 = vpop.trf.xlu0
        %v1518 = vpop.trf.xlu0
        %v1519 = vpop.trf.xlu0
        %v1520 = vpop.trf.xlu0
        %v1521 = vpop.trf.xlu0
        %v1522 = vpop.trf.xlu0
        %v1523 = vpop.trf.xlu0
        %v1524 = vpop.trf.xlu0
        %1525 = vxpose.xlu0.b32.start [1/16] %v791, 128
        %1526 = vxpose.xlu0.b32.cont [2/16] %v794, 128
        %1527 = vxpose.xlu0.b32.cont [3/16] %v797, 128
        %1528 = vxpose.xlu0.b32.cont [4/16] %v800, 128
        %1529 = vxpose.xlu0.b32.cont [5/16] %v803, 128
        %1530 = vxpose.xlu0.b32.cont [6/16] %v806, 128
        %1531 = vxpose.xlu0.b32.cont [7/16] %v809, 128
        %1532 = vxpose.xlu0.b32.cont [8/16] %v812, 128
        %1533 = vxpose.xlu0.b32.cont [9/16] %v815, 128
        %1534 = vxpose.xlu0.b32.cont [10/16] %v818, 128
        %1535 = vxpose.xlu0.b32.cont [11/16] %v821, 128
        %1536 = vxpose.xlu0.b32.cont [12/16] %v824, 128
        %1537 = vxpose.xlu0.b32.cont [13/16] %v827, 128
        %1538 = vxpose.xlu0.b32.cont [14/16] %v830, 128
        %1539 = vxpose.xlu0.b32.cont [15/16] %v833, 128
        %1540 = vxpose.xlu0.b32.end [16/16] %v836, 128
        %v1541 = vpop.trf.xlu0
        %v1542 = vpop.trf.xlu0
        %v1543 = vpop.trf.xlu0
        %v1544 = vpop.trf.xlu0
        %v1545 = vpop.trf.xlu0
        %v1546 = vpop.trf.xlu0
        %v1547 = vpop.trf.xlu0
        %v1548 = vpop.trf.xlu0
        %v1549 = vpop.trf.xlu0
        %v1550 = vpop.trf.xlu0
        %v1551 = vpop.trf.xlu0
        %v1552 = vpop.trf.xlu0
        %v1553 = vpop.trf.xlu0
        %v1554 = vpop.trf.xlu0
        %v1555 = vpop.trf.xlu0
        %v1556 = vpop.trf.xlu0
        %1557 = vxpose.xlu0.b32.start [1/16] %v839, 128
        %1558 = vxpose.xlu0.b32.cont [2/16] %v842, 128
        %1559 = vxpose.xlu0.b32.cont [3/16] %v845, 128
        %1560 = vxpose.xlu0.b32.cont [4/16] %v848, 128
        %1561 = vxpose.xlu0.b32.cont [5/16] %v851, 128
        %1562 = vxpose.xlu0.b32.cont [6/16] %v854, 128
        %1563 = vxpose.xlu0.b32.cont [7/16] %v857, 128
        %1564 = vxpose.xlu0.b32.cont [8/16] %v860, 128
        %1565 = vxpose.xlu0.b32.cont [9/16] %v863, 128
        %1566 = vxpose.xlu0.b32.cont [10/16] %v866, 128
        %1567 = vxpose.xlu0.b32.cont [11/16] %v869, 128
        %1568 = vxpose.xlu0.b32.cont [12/16] %v872, 128
        %1569 = vxpose.xlu0.b32.cont [13/16] %v875, 128
        %1570 = vxpose.xlu0.b32.cont [14/16] %v878, 128
        %1571 = vxpose.xlu0.b32.cont [15/16] %v881, 128
        %1572 = vxpose.xlu0.b32.end [16/16] %v884, 128
        %v1573 = vpop.trf.xlu0
        %v1574 = vpop.trf.xlu0
        %v1575 = vpop.trf.xlu0
        %v1576 = vpop.trf.xlu0
        %v1577 = vpop.trf.xlu0
        %v1578 = vpop.trf.xlu0
        %v1579 = vpop.trf.xlu0
        %v1580 = vpop.trf.xlu0
        %v1581 = vpop.trf.xlu0
        %v1582 = vpop.trf.xlu0
        %v1583 = vpop.trf.xlu0
        %v1584 = vpop.trf.xlu0
        %v1585 = vpop.trf.xlu0
        %v1586 = vpop.trf.xlu0
        %v1587 = vpop.trf.xlu0
        %v1588 = vpop.trf.xlu0
        %1589 = vxpose.xlu0.b32.start [1/16] %v887, 128
        %1590 = vxpose.xlu0.b32.cont [2/16] %v890, 128
        %1591 = vxpose.xlu0.b32.cont [3/16] %v893, 128
        %1592 = vxpose.xlu0.b32.cont [4/16] %v896, 128
        %1593 = vxpose.xlu0.b32.cont [5/16] %v899, 128
        %1594 = vxpose.xlu0.b32.cont [6/16] %v902, 128
        %1595 = vxpose.xlu0.b32.cont [7/16] %v905, 128
        %1596 = vxpose.xlu0.b32.cont [8/16] %v908, 128
        %1597 = vxpose.xlu0.b32.cont [9/16] %v911, 128
        %1598 = vxpose.xlu0.b32.cont [10/16] %v914, 128
        %1599 = vxpose.xlu0.b32.cont [11/16] %v917, 128
        %1600 = vxpose.xlu0.b32.cont [12/16] %v920, 128
        %1601 = vxpose.xlu0.b32.cont [13/16] %v923, 128
        %1602 = vxpose.xlu0.b32.cont [14/16] %v926, 128
        %1603 = vxpose.xlu0.b32.cont [15/16] %v929, 128
        %1604 = vxpose.xlu0.b32.end [16/16] %v932, 128
        %v1605 = vpop.trf.xlu0
        %v1606 = vpop.trf.xlu0
        %v1607 = vpop.trf.xlu0
        %v1608 = vpop.trf.xlu0
        %v1609 = vpop.trf.xlu0
        %v1610 = vpop.trf.xlu0
        %v1611 = vpop.trf.xlu0
        %v1612 = vpop.trf.xlu0
        %v1613 = vpop.trf.xlu0
        %v1614 = vpop.trf.xlu0
        %v1615 = vpop.trf.xlu0
        %v1616 = vpop.trf.xlu0
        %v1617 = vpop.trf.xlu0
        %v1618 = vpop.trf.xlu0
        %v1619 = vpop.trf.xlu0
        %v1620 = vpop.trf.xlu0
        %1621 = vxpose.xlu0.b32.start [1/16] %v935, 128
        %1622 = vxpose.xlu0.b32.cont [2/16] %v938, 128
        %1623 = vxpose.xlu0.b32.cont [3/16] %v941, 128
        %1624 = vxpose.xlu0.b32.cont [4/16] %v944, 128
        %1625 = vxpose.xlu0.b32.cont [5/16] %v947, 128
        %1626 = vxpose.xlu0.b32.cont [6/16] %v950, 128
        %1627 = vxpose.xlu0.b32.cont [7/16] %v953, 128
        %1628 = vxpose.xlu0.b32.cont [8/16] %v956, 128
        %1629 = vxpose.xlu0.b32.cont [9/16] %v959, 128
        %1630 = vxpose.xlu0.b32.cont [10/16] %v962, 128
        %1631 = vxpose.xlu0.b32.cont [11/16] %v965, 128
        %1632 = vxpose.xlu0.b32.cont [12/16] %v968, 128
        %1633 = vxpose.xlu0.b32.cont [13/16] %v971, 128
        %1634 = vxpose.xlu0.b32.cont [14/16] %v974, 128
        %1635 = vxpose.xlu0.b32.cont [15/16] %v977, 128
        %1636 = vxpose.xlu0.b32.end [16/16] %v980, 128
        %v1637 = vpop.trf.xlu0
        %v1638 = vpop.trf.xlu0
        %v1639 = vpop.trf.xlu0
        %v1640 = vpop.trf.xlu0
        %v1641 = vpop.trf.xlu0
        %v1642 = vpop.trf.xlu0
        %v1643 = vpop.trf.xlu0
        %v1644 = vpop.trf.xlu0
        %v1645 = vpop.trf.xlu0
        %v1646 = vpop.trf.xlu0
        %v1647 = vpop.trf.xlu0
        %v1648 = vpop.trf.xlu0
        %v1649 = vpop.trf.xlu0
        %v1650 = vpop.trf.xlu0
        %v1651 = vpop.trf.xlu0
        %v1652 = vpop.trf.xlu0
        %1653 = vxpose.xlu0.b32.start [1/16] %v983, 128
        %1654 = vxpose.xlu0.b32.cont [2/16] %v986, 128
        %1655 = vxpose.xlu0.b32.cont [3/16] %v989, 128
        %1656 = vxpose.xlu0.b32.cont [4/16] %v992, 128
        %1657 = vxpose.xlu0.b32.cont [5/16] %v995, 128
        %1658 = vxpose.xlu0.b32.cont [6/16] %v998, 128
        %1659 = vxpose.xlu0.b32.cont [7/16] %v1001, 128
        %1660 = vxpose.xlu0.b32.cont [8/16] %v1004, 128
        %1661 = vxpose.xlu0.b32.cont [9/16] %v1007, 128
        %1662 = vxpose.xlu0.b32.cont [10/16] %v1010, 128
        %1663 = vxpose.xlu0.b32.cont [11/16] %v1013, 128
        %1664 = vxpose.xlu0.b32.cont [12/16] %v1016, 128
        %1665 = vxpose.xlu0.b32.cont [13/16] %v1019, 128
        %1666 = vxpose.xlu0.b32.cont [14/16] %v1022, 128
        %1667 = vxpose.xlu0.b32.cont [15/16] %v1025, 128
        %1668 = vxpose.xlu0.b32.end [16/16] %v1028, 128
        %v1669 = vpop.trf.xlu0
        %v1670 = vpop.trf.xlu0
        %v1671 = vpop.trf.xlu0
        %v1672 = vpop.trf.xlu0
        %v1673 = vpop.trf.xlu0
        %v1674 = vpop.trf.xlu0
        %v1675 = vpop.trf.xlu0
        %v1676 = vpop.trf.xlu0
        %v1677 = vpop.trf.xlu0
        %v1678 = vpop.trf.xlu0
        %v1679 = vpop.trf.xlu0
        %v1680 = vpop.trf.xlu0
        %v1681 = vpop.trf.xlu0
        %v1682 = vpop.trf.xlu0
        %v1683 = vpop.trf.xlu0
        %v1684 = vpop.trf.xlu0
        %1685 = vxpose.xlu0.b32.start [1/16] %v1031, 128
        %1686 = vxpose.xlu0.b32.cont [2/16] %v1034, 128
        %1687 = vxpose.xlu0.b32.cont [3/16] %v1037, 128
        %1688 = vxpose.xlu0.b32.cont [4/16] %v1040, 128
        %1689 = vxpose.xlu0.b32.cont [5/16] %v1043, 128
        %1690 = vxpose.xlu0.b32.cont [6/16] %v1046, 128
        %1691 = vxpose.xlu0.b32.cont [7/16] %v1049, 128
        %1692 = vxpose.xlu0.b32.cont [8/16] %v1052, 128
        %1693 = vxpose.xlu0.b32.cont [9/16] %v1055, 128
        %1694 = vxpose.xlu0.b32.cont [10/16] %v1058, 128
        %1695 = vxpose.xlu0.b32.cont [11/16] %v1061, 128
        %1696 = vxpose.xlu0.b32.cont [12/16] %v1064, 128
        %1697 = vxpose.xlu0.b32.cont [13/16] %v1067, 128
        %1698 = vxpose.xlu0.b32.cont [14/16] %v1070, 128
        %1699 = vxpose.xlu0.b32.cont [15/16] %v1073, 128
        %1700 = vxpose.xlu0.b32.end [16/16] %v1076, 128
        %v1701 = vpop.trf.xlu0
        %v1702 = vpop.trf.xlu0
        %v1703 = vpop.trf.xlu0
        %v1704 = vpop.trf.xlu0
        %v1705 = vpop.trf.xlu0
        %v1706 = vpop.trf.xlu0
        %v1707 = vpop.trf.xlu0
        %v1708 = vpop.trf.xlu0
        %v1709 = vpop.trf.xlu0
        %v1710 = vpop.trf.xlu0
        %v1711 = vpop.trf.xlu0
        %v1712 = vpop.trf.xlu0
        %v1713 = vpop.trf.xlu0
        %v1714 = vpop.trf.xlu0
        %v1715 = vpop.trf.xlu0
        %v1716 = vpop.trf.xlu0
        %1717 = vxpose.xlu0.b32.start [1/16] %v1079, 128
        %1718 = vxpose.xlu0.b32.cont [2/16] %v1082, 128
        %1719 = vxpose.xlu0.b32.cont [3/16] %v1085, 128
        %1720 = vxpose.xlu0.b32.cont [4/16] %v1088, 128
        %1721 = vxpose.xlu0.b32.cont [5/16] %v1091, 128
        %1722 = vxpose.xlu0.b32.cont [6/16] %v1094, 128
        %1723 = vxpose.xlu0.b32.cont [7/16] %v1097, 128
        %1724 = vxpose.xlu0.b32.cont [8/16] %v1100, 128
        %1725 = vxpose.xlu0.b32.cont [9/16] %v1103, 128
        %1726 = vxpose.xlu0.b32.cont [10/16] %v1106, 128
        %1727 = vxpose.xlu0.b32.cont [11/16] %v1109, 128
        %1728 = vxpose.xlu0.b32.cont [12/16] %v1112, 128
        %1729 = vxpose.xlu0.b32.cont [13/16] %v1115, 128
        %1730 = vxpose.xlu0.b32.cont [14/16] %v1118, 128
        %1731 = vxpose.xlu0.b32.cont [15/16] %v1121, 128
        %1732 = vxpose.xlu0.b32.end [16/16] %v1124, 128
        %v1733 = vpop.trf.xlu0
        %v1734 = vpop.trf.xlu0
        %v1735 = vpop.trf.xlu0
        %v1736 = vpop.trf.xlu0
        %v1737 = vpop.trf.xlu0
        %v1738 = vpop.trf.xlu0
        %v1739 = vpop.trf.xlu0
        %v1740 = vpop.trf.xlu0
        %v1741 = vpop.trf.xlu0
        %v1742 = vpop.trf.xlu0
        %v1743 = vpop.trf.xlu0
        %v1744 = vpop.trf.xlu0
        %v1745 = vpop.trf.xlu0
        %v1746 = vpop.trf.xlu0
        %v1747 = vpop.trf.xlu0
        %v1748 = vpop.trf.xlu0
        %1749 = vxpose.xlu0.b32.start [1/16] %v1127, 128
        %1750 = vxpose.xlu0.b32.cont [2/16] %v1130, 128
        %1751 = vxpose.xlu0.b32.cont [3/16] %v1133, 128
        %1752 = vxpose.xlu0.b32.cont [4/16] %v1136, 128
        %1753 = vxpose.xlu0.b32.cont [5/16] %v1139, 128
        %1754 = vxpose.xlu0.b32.cont [6/16] %v1142, 128
        %1755 = vxpose.xlu0.b32.cont [7/16] %v1145, 128
        %1756 = vxpose.xlu0.b32.cont [8/16] %v1148, 128
        %1757 = vxpose.xlu0.b32.cont [9/16] %v1151, 128
        %1758 = vxpose.xlu0.b32.cont [10/16] %v1154, 128
        %1759 = vxpose.xlu0.b32.cont [11/16] %v1157, 128
        %1760 = vxpose.xlu0.b32.cont [12/16] %v1160, 128
        %1761 = vxpose.xlu0.b32.cont [13/16] %v1163, 128
        %1762 = vxpose.xlu0.b32.cont [14/16] %v1166, 128
        %1763 = vxpose.xlu0.b32.cont [15/16] %v1169, 128
        %1764 = vxpose.xlu0.b32.end [16/16] %v1172, 128
        %v1765 = vpop.trf.xlu0
        %v1766 = vpop.trf.xlu0
        %v1767 = vpop.trf.xlu0
        %v1768 = vpop.trf.xlu0
        %v1769 = vpop.trf.xlu0
        %v1770 = vpop.trf.xlu0
        %v1771 = vpop.trf.xlu0
        %v1772 = vpop.trf.xlu0
        %v1773 = vpop.trf.xlu0
        %v1774 = vpop.trf.xlu0
        %v1775 = vpop.trf.xlu0
        %v1776 = vpop.trf.xlu0
        %v1777 = vpop.trf.xlu0
        %v1778 = vpop.trf.xlu0
        %v1779 = vpop.trf.xlu0
        %v1780 = vpop.trf.xlu0
        %1781 = vxpose.xlu0.b32.start [1/16] %v1175, 128
        %1782 = vxpose.xlu0.b32.cont [2/16] %v1178, 128
        %1783 = vxpose.xlu0.b32.cont [3/16] %v1181, 128
        %1784 = vxpose.xlu0.b32.cont [4/16] %v1184, 128
        %1785 = vxpose.xlu0.b32.cont [5/16] %v1187, 128
        %1786 = vxpose.xlu0.b32.cont [6/16] %v1190, 128
        %1787 = vxpose.xlu0.b32.cont [7/16] %v1193, 128
        %1788 = vxpose.xlu0.b32.cont [8/16] %v1196, 128
        %1789 = vxpose.xlu0.b32.cont [9/16] %v1199, 128
        %1790 = vxpose.xlu0.b32.cont [10/16] %v1202, 128
        %1791 = vxpose.xlu0.b32.cont [11/16] %v1205, 128
        %1792 = vxpose.xlu0.b32.cont [12/16] %v1208, 128
        %1793 = vxpose.xlu0.b32.cont [13/16] %v1211, 128
        %1794 = vxpose.xlu0.b32.cont [14/16] %v1214, 128
        %1795 = vxpose.xlu0.b32.cont [15/16] %v1217, 128
        %1796 = vxpose.xlu0.b32.end [16/16] %v1220, 128
        %v1797 = vpop.trf.xlu0
        %v1798 = vpop.trf.xlu0
        %v1799 = vpop.trf.xlu0
        %v1800 = vpop.trf.xlu0
        %v1801 = vpop.trf.xlu0
        %v1802 = vpop.trf.xlu0
        %v1803 = vpop.trf.xlu0
        %v1804 = vpop.trf.xlu0
        %v1805 = vpop.trf.xlu0
        %v1806 = vpop.trf.xlu0
        %v1807 = vpop.trf.xlu0
        %v1808 = vpop.trf.xlu0
        %v1809 = vpop.trf.xlu0
        %v1810 = vpop.trf.xlu0
        %v1811 = vpop.trf.xlu0
        %v1812 = vpop.trf.xlu0
        %1813 = vxpose.xlu0.b32.start [1/16] %v1223, 128
        %1814 = vxpose.xlu0.b32.cont [2/16] %v1226, 128
        %1815 = vxpose.xlu0.b32.cont [3/16] %v1229, 128
        %1816 = vxpose.xlu0.b32.cont [4/16] %v1232, 128
        %1817 = vxpose.xlu0.b32.cont [5/16] %v1235, 128
        %1818 = vxpose.xlu0.b32.cont [6/16] %v1238, 128
        %1819 = vxpose.xlu0.b32.cont [7/16] %v1241, 128
        %1820 = vxpose.xlu0.b32.cont [8/16] %v1244, 128
        %1821 = vxpose.xlu0.b32.cont [9/16] %v1247, 128
        %1822 = vxpose.xlu0.b32.cont [10/16] %v1250, 128
        %1823 = vxpose.xlu0.b32.cont [11/16] %v1253, 128
        %1824 = vxpose.xlu0.b32.cont [12/16] %v1256, 128
        %1825 = vxpose.xlu0.b32.cont [13/16] %v1259, 128
        %1826 = vxpose.xlu0.b32.cont [14/16] %v1262, 128
        %1827 = vxpose.xlu0.b32.cont [15/16] %v1265, 128
        %1828 = vxpose.xlu0.b32.end [16/16] %v1268, 128
        %v1829 = vpop.trf.xlu0
        %v1830 = vpop.trf.xlu0
        %v1831 = vpop.trf.xlu0
        %v1832 = vpop.trf.xlu0
        %v1833 = vpop.trf.xlu0
        %v1834 = vpop.trf.xlu0
        %v1835 = vpop.trf.xlu0
        %v1836 = vpop.trf.xlu0
        %v1837 = vpop.trf.xlu0
        %v1838 = vpop.trf.xlu0
        %v1839 = vpop.trf.xlu0
        %v1840 = vpop.trf.xlu0
        %v1841 = vpop.trf.xlu0
        %v1842 = vpop.trf.xlu0
        %v1843 = vpop.trf.xlu0
        %v1844 = vpop.trf.xlu0
        %1845 = vxpose.xlu0.b32.start [1/16] %v1271, 128
        %1846 = vxpose.xlu0.b32.cont [2/16] %v1274, 128
        %1847 = vxpose.xlu0.b32.cont [3/16] %v1277, 128
        %1848 = vxpose.xlu0.b32.cont [4/16] %v1280, 128
        %1849 = vxpose.xlu0.b32.cont [5/16] %v1283, 128
        %1850 = vxpose.xlu0.b32.cont [6/16] %v1286, 128
        %1851 = vxpose.xlu0.b32.cont [7/16] %v1289, 128
        %1852 = vxpose.xlu0.b32.cont [8/16] %v1292, 128
        %1853 = vxpose.xlu0.b32.cont [9/16] %v1295, 128
        %1854 = vxpose.xlu0.b32.cont [10/16] %v1298, 128
        %1855 = vxpose.xlu0.b32.cont [11/16] %v1301, 128
        %1856 = vxpose.xlu0.b32.cont [12/16] %v1304, 128
        %1857 = vxpose.xlu0.b32.cont [13/16] %v1307, 128
        %1858 = vxpose.xlu0.b32.cont [14/16] %v1310, 128
        %1859 = vxpose.xlu0.b32.cont [15/16] %v1313, 128
        %1860 = vxpose.xlu0.b32.end [16/16] %v1316, 128
        %v1861 = vpop.trf.xlu0
        %v1862 = vpop.trf.xlu0
        %v1863 = vpop.trf.xlu0
        %v1864 = vpop.trf.xlu0
        %v1865 = vpop.trf.xlu0
        %v1866 = vpop.trf.xlu0
        %v1867 = vpop.trf.xlu0
        %v1868 = vpop.trf.xlu0
        %v1869 = vpop.trf.xlu0
        %v1870 = vpop.trf.xlu0
        %v1871 = vpop.trf.xlu0
        %v1872 = vpop.trf.xlu0
        %v1873 = vpop.trf.xlu0
        %v1874 = vpop.trf.xlu0
        %v1875 = vpop.trf.xlu0
        %v1876 = vpop.trf.xlu0
        %1877 = vxpose.xlu0.b32.start [1/16] %v1319, 128
        %1878 = vxpose.xlu0.b32.cont [2/16] %v1322, 128
        %1879 = vxpose.xlu0.b32.cont [3/16] %v1325, 128
        %1880 = vxpose.xlu0.b32.cont [4/16] %v1328, 128
        %1881 = vxpose.xlu0.b32.cont [5/16] %v1331, 128
        %1882 = vxpose.xlu0.b32.cont [6/16] %v1334, 128
        %1883 = vxpose.xlu0.b32.cont [7/16] %v1337, 128
        %1884 = vxpose.xlu0.b32.cont [8/16] %v1340, 128
        %1885 = vxpose.xlu0.b32.cont [9/16] %v1343, 128
        %1886 = vxpose.xlu0.b32.cont [10/16] %v1346, 128
        %1887 = vxpose.xlu0.b32.cont [11/16] %v1349, 128
        %1888 = vxpose.xlu0.b32.cont [12/16] %v1352, 128
        %1889 = vxpose.xlu0.b32.cont [13/16] %v1355, 128
        %1890 = vxpose.xlu0.b32.cont [14/16] %v1358, 128
        %1891 = vxpose.xlu0.b32.cont [15/16] %v1361, 128
        %1892 = vxpose.xlu0.b32.end [16/16] %v1364, 128
        %v1893 = vpop.trf.xlu0
        %v1894 = vpop.trf.xlu0
        %v1895 = vpop.trf.xlu0
        %v1896 = vpop.trf.xlu0
        %v1897 = vpop.trf.xlu0
        %v1898 = vpop.trf.xlu0
        %v1899 = vpop.trf.xlu0
        %v1900 = vpop.trf.xlu0
        %v1901 = vpop.trf.xlu0
        %v1902 = vpop.trf.xlu0
        %v1903 = vpop.trf.xlu0
        %v1904 = vpop.trf.xlu0
        %v1905 = vpop.trf.xlu0
        %v1906 = vpop.trf.xlu0
        %v1907 = vpop.trf.xlu0
        %v1908 = vpop.trf.xlu0
        %1909 = vxpose.xlu0.b32.start [1/16] %v1367, 128
        %1910 = vxpose.xlu0.b32.cont [2/16] %v1370, 128
        %1911 = vxpose.xlu0.b32.cont [3/16] %v1373, 128
        %1912 = vxpose.xlu0.b32.cont [4/16] %v1376, 128
        %1913 = vxpose.xlu0.b32.cont [5/16] %v1379, 128
        %1914 = vxpose.xlu0.b32.cont [6/16] %v1382, 128
        %1915 = vxpose.xlu0.b32.cont [7/16] %v1385, 128
        %1916 = vxpose.xlu0.b32.cont [8/16] %v1388, 128
        %1917 = vxpose.xlu0.b32.cont [9/16] %v1391, 128
        %1918 = vxpose.xlu0.b32.cont [10/16] %v1394, 128
        %1919 = vxpose.xlu0.b32.cont [11/16] %v1397, 128
        %1920 = vxpose.xlu0.b32.cont [12/16] %v1400, 128
        %1921 = vxpose.xlu0.b32.cont [13/16] %v1403, 128
        %1922 = vxpose.xlu0.b32.cont [14/16] %v1406, 128
        %1923 = vxpose.xlu0.b32.cont [15/16] %v1409, 128
        %1924 = vxpose.xlu0.b32.end [16/16] %v1412, 128
        %v1925 = vpop.trf.xlu0
        %v1926 = vpop.trf.xlu0
        %v1927 = vpop.trf.xlu0
        %v1928 = vpop.trf.xlu0
        %v1929 = vpop.trf.xlu0
        %v1930 = vpop.trf.xlu0
        %v1931 = vpop.trf.xlu0
        %v1932 = vpop.trf.xlu0
        %v1933 = vpop.trf.xlu0
        %v1934 = vpop.trf.xlu0
        %v1935 = vpop.trf.xlu0
        %v1936 = vpop.trf.xlu0
        %v1937 = vpop.trf.xlu0
        %v1938 = vpop.trf.xlu0
        %v1939 = vpop.trf.xlu0
        %v1940 = vpop.trf.xlu0
        %1941 = vxpose.xlu0.b32.start [1/16] %v1415, 128
        %1942 = vxpose.xlu0.b32.cont [2/16] %v1418, 128
        %1943 = vxpose.xlu0.b32.cont [3/16] %v1421, 128
        %1944 = vxpose.xlu0.b32.cont [4/16] %v1424, 128
        %1945 = vxpose.xlu0.b32.cont [5/16] %v1427, 128
        %1946 = vxpose.xlu0.b32.cont [6/16] %v1430, 128
        %1947 = vxpose.xlu0.b32.cont [7/16] %v1433, 128
        %1948 = vxpose.xlu0.b32.cont [8/16] %v1436, 128
        %1949 = vxpose.xlu0.b32.cont [9/16] %v1439, 128
        %1950 = vxpose.xlu0.b32.cont [10/16] %v1442, 128
        %1951 = vxpose.xlu0.b32.cont [11/16] %v1445, 128
        %1952 = vxpose.xlu0.b32.cont [12/16] %v1448, 128
        %1953 = vxpose.xlu0.b32.cont [13/16] %v1451, 128
        %1954 = vxpose.xlu0.b32.cont [14/16] %v1454, 128
        %1955 = vxpose.xlu0.b32.cont [15/16] %v1457, 128
        %1956 = vxpose.xlu0.b32.end [16/16] %v1460, 128
        %v1957 = vpop.trf.xlu0
        %v1958 = vpop.trf.xlu0
        %v1959 = vpop.trf.xlu0
        %v1960 = vpop.trf.xlu0
        %v1961 = vpop.trf.xlu0
        %v1962 = vpop.trf.xlu0
        %v1963 = vpop.trf.xlu0
        %v1964 = vpop.trf.xlu0
        %v1965 = vpop.trf.xlu0
        %v1966 = vpop.trf.xlu0
        %v1967 = vpop.trf.xlu0
        %v1968 = vpop.trf.xlu0
        %v1969 = vpop.trf.xlu0
        %v1970 = vpop.trf.xlu0
        %v1971 = vpop.trf.xlu0
        %v1972 = vpop.trf.xlu0
        %s1973 = sld [smem:[#allocation2]]
        %v1974 = vstv %s1973
        %v1975 = vadd.f32 %v1477, %v1974
        %v1976 = vadd.f32 %v1509, %v1974
        %v1977 = vadd.f32 %v1541, %v1974
        %v1978 = vadd.f32 %v1573, %v1974
        %v1979 = vadd.f32 %v1605, %v1974
        %v1980 = vadd.f32 %v1637, %v1974
        %v1981 = vadd.f32 %v1669, %v1974
        %v1982 = vadd.f32 %v1701, %v1974
        %v1983 = vadd.f32 %v1733, %v1974
        %v1984 = vadd.f32 %v1765, %v1974
        %v1985 = vadd.f32 %v1797, %v1974
        %v1986 = vadd.f32 %v1829, %v1974
        %v1987 = vadd.f32 %v1861, %v1974
        %v1988 = vadd.f32 %v1893, %v1974
        %v1989 = vadd.f32 %v1925, %v1974
        %v1990 = vadd.f32 %v1957, %v1974
        %v1991 = vxor.u32 %v1975, 2147483648
        %v1992 = vxor.u32 %v1976, 2147483648
        %v1993 = vxor.u32 %v1977, 2147483648
        %v1994 = vxor.u32 %v1978, 2147483648
        %v1995 = vxor.u32 %v1979, 2147483648
        %v1996 = vxor.u32 %v1980, 2147483648
        %v1997 = vxor.u32 %v1981, 2147483648
        %v1998 = vxor.u32 %v1982, 2147483648
        %v1999 = vxor.u32 %v1983, 2147483648
        %v2000 = vxor.u32 %v1984, 2147483648
        %v2001 = vxor.u32 %v1985, 2147483648
        %v2002 = vxor.u32 %v1986, 2147483648
        %v2003 = vxor.u32 %v1987, 2147483648
        %v2004 = vxor.u32 %v1988, 2147483648
        %v2005 = vxor.u32 %v1989, 2147483648
        %v2006 = vxor.u32 %v1990, 2147483648
        %v2007 = vmul.f32 %v1991, 1.442695
        %v2008 = vpow.pop %v2007
        %v2009 = vmul.f32 %v1992, 1.442695
        %v2010 = vpow.pop %v2009
        %v2011 = vmul.f32 %v1993, 1.442695
        %v2012 = vpow.pop %v2011
        %v2013 = vmul.f32 %v1994, 1.442695
        %v2014 = vpow.pop %v2013
        %v2015 = vmul.f32 %v1995, 1.442695
        %v2016 = vpow.pop %v2015
        %v2017 = vmul.f32 %v1996, 1.442695
        %v2018 = vpow.pop %v2017
        %v2019 = vmul.f32 %v1997, 1.442695
        %v2020 = vpow.pop %v2019
        %v2021 = vmul.f32 %v1998, 1.442695
        %v2022 = vpow.pop %v2021
        %v2023 = vmul.f32 %v1999, 1.442695
        %v2024 = vpow.pop %v2023
        %v2025 = vmul.f32 %v2000, 1.442695
        %v2026 = vpow.pop %v2025
        %v2027 = vmul.f32 %v2001, 1.442695
        %v2028 = vpow.pop %v2027
        %v2029 = vmul.f32 %v2002, 1.442695
        %v2030 = vpow.pop %v2029
        %v2031 = vmul.f32 %v2003, 1.442695
        %v2032 = vpow.pop %v2031
        %v2033 = vmul.f32 %v2004, 1.442695
        %v2034 = vpow.pop %v2033
        %v2035 = vmul.f32 %v2005, 1.442695
        %v2036 = vpow.pop %v2035
        %v2037 = vmul.f32 %v2006, 1.442695
        %v2038 = vpow.pop %v2037
        %v2039 = vadd.f32 %v2008, 1.0
        %v2040 = vadd.f32 %v2010, 1.0
        %v2041 = vadd.f32 %v2012, 1.0
        %v2042 = vadd.f32 %v2014, 1.0
        %v2043 = vadd.f32 %v2016, 1.0
        %v2044 = vadd.f32 %v2018, 1.0
        %v2045 = vadd.f32 %v2020, 1.0
        %v2046 = vadd.f32 %v2022, 1.0
        %v2047 = vadd.f32 %v2024, 1.0
        %v2048 = vadd.f32 %v2026, 1.0
        %v2049 = vadd.f32 %v2028, 1.0
        %v2050 = vadd.f32 %v2030, 1.0
        %v2051 = vadd.f32 %v2032, 1.0
        %v2052 = vadd.f32 %v2034, 1.0
        %v2053 = vadd.f32 %v2036, 1.0
        %v2054 = vadd.f32 %v2038, 1.0
        %v2055 = vrcp.pop %v2039
        %v2056 = vmul.f32 1.0, %v2055
        %v2057 = vrcp.pop %v2040
        %v2058 = vmul.f32 1.0, %v2057
        %v2059 = vrcp.pop %v2041
        %v2060 = vmul.f32 1.0, %v2059
        %v2061 = vrcp.pop %v2042
        %v2062 = vmul.f32 1.0, %v2061
        %v2063 = vrcp.pop %v2043
        %v2064 = vmul.f32 1.0, %v2063
        %v2065 = vrcp.pop %v2044
        %v2066 = vmul.f32 1.0, %v2065
        %v2067 = vrcp.pop %v2045
        %v2068 = vmul.f32 1.0, %v2067
        %v2069 = vrcp.pop %v2046
        %v2070 = vmul.f32 1.0, %v2069
        %v2071 = vrcp.pop %v2047
        %v2072 = vmul.f32 1.0, %v2071
        %v2073 = vrcp.pop %v2048
        %v2074 = vmul.f32 1.0, %v2073
        %v2075 = vrcp.pop %v2049
        %v2076 = vmul.f32 1.0, %v2075
        %v2077 = vrcp.pop %v2050
        %v2078 = vmul.f32 1.0, %v2077
        %v2079 = vrcp.pop %v2051
        %v2080 = vmul.f32 1.0, %v2079
        %v2081 = vrcp.pop %v2052
        %v2082 = vmul.f32 1.0, %v2081
        %v2083 = vrcp.pop %v2053
        %v2084 = vmul.f32 1.0, %v2083
        %v2085 = vrcp.pop %v2054
        %v2086 = vmul.f32 1.0, %v2085
        %v2103 = vcombine.low %v2056, %v2058
        %v2104 = vcombine.low %v2060, %v2062
        %v2105 = vcombine.low %v2064, %v2066
        %v2106 = vcombine.low %v2068, %v2070
        %v2108 = vunpack.c.l.s4 1966171168
        %v2109 = vunpack.c.0.s8 %v2108
        %v2110 = vlaneseq
        %v2111 = vshrl.u32 %v2110, 7
        %v2112 = vsub.s32 %v2109, %v2111
        %v2113 = vrot.slane %v2103, %v2112
        %v2115 = vunpack.c.l.s4 1966171168
        %v2116 = vunpack.c.0.s8 %v2115
        %v2117 = vlaneseq
        %v2118 = vshrl.u32 %v2117, 7
        %v2119 = vsub.s32 %v2116, %v2118
        %v2120 = vrot.slane %v2104, %v2119
        %v2122 = vunpack.c.l.s4 1966171168
        %v2123 = vunpack.c.0.s8 %v2122
        %v2124 = vlaneseq
        %v2125 = vshrl.u32 %v2124, 7
        %v2126 = vsub.s32 %v2123, %v2125
        %v2127 = vrot.slane %v2105, %v2126
        %v2129 = vunpack.c.l.s4 1966171168
        %v2130 = vunpack.c.0.s8 %v2129
        %v2131 = vlaneseq
        %v2132 = vshrl.u32 %v2131, 7
        %v2133 = vsub.s32 %v2130, %v2132
        %v2134 = vrot.slane %v2106, %v2133
        %v2135 = vcombine.low %v2113, %v2120
        %v2136 = vcombine.low %v2127, %v2134
        %v2138 = vunpack.c.l.s4 1966171168
        %v2139 = vunpack.c.0.s8 %v2138
        %v2140 = vlaneseq
        %v2141 = vshrl.u32 %v2140, 7
        %v2142 = vsub.s32 %v2139, %v2141
        %v2143 = vrot.slane %v2135, %v2142
        %v2145 = vunpack.c.l.s4 1966171168
        %v2146 = vunpack.c.0.s8 %v2145
        %v2147 = vlaneseq
        %v2148 = vshrl.u32 %v2147, 7
        %v2149 = vsub.s32 %v2146, %v2148
        %v2150 = vrot.slane %v2136, %v2149
        %v2151 = vcombine.low %v2143, %v2150
        %v2152 = vcombine.low %v2072, %v2074
        %v2153 = vcombine.low %v2076, %v2078
        %v2154 = vcombine.low %v2080, %v2082
        %v2155 = vcombine.low %v2084, %v2086
        %v2157 = vunpack.c.l.s4 1966171168
        %v2158 = vunpack.c.0.s8 %v2157
        %v2159 = vlaneseq
        %v2160 = vshrl.u32 %v2159, 7
        %v2161 = vsub.s32 %v2158, %v2160
        %v2162 = vrot.slane %v2152, %v2161
        %v2164 = vunpack.c.l.s4 1966171168
        %v2165 = vunpack.c.0.s8 %v2164
        %v2166 = vlaneseq
        %v2167 = vshrl.u32 %v2166, 7
        %v2168 = vsub.s32 %v2165, %v2167
        %v2169 = vrot.slane %v2153, %v2168
        %v2171 = vunpack.c.l.s4 1966171168
        %v2172 = vunpack.c.0.s8 %v2171
        %v2173 = vlaneseq
        %v2174 = vshrl.u32 %v2173, 7
        %v2175 = vsub.s32 %v2172, %v2174
        %v2176 = vrot.slane %v2154, %v2175
        %v2178 = vunpack.c.l.s4 1966171168
        %v2179 = vunpack.c.0.s8 %v2178
        %v2180 = vlaneseq
        %v2181 = vshrl.u32 %v2180, 7
        %v2182 = vsub.s32 %v2179, %v2181
        %v2183 = vrot.slane %v2155, %v2182
        %v2184 = vcombine.low %v2162, %v2169
        %v2185 = vcombine.low %v2176, %v2183
        %v2187 = vunpack.c.l.s4 1966171168
        %v2188 = vunpack.c.0.s8 %v2187
        %v2189 = vlaneseq
        %v2190 = vshrl.u32 %v2189, 7
        %v2191 = vsub.s32 %v2188, %v2190
        %v2192 = vrot.slane %v2184, %v2191
        %v2194 = vunpack.c.l.s4 1966171168
        %v2195 = vunpack.c.0.s8 %v2194
        %v2196 = vlaneseq
        %v2197 = vshrl.u32 %v2196, 7
        %v2198 = vsub.s32 %v2195, %v2197
        %v2199 = vrot.slane %v2185, %v2198
        %v2200 = vcombine.low %v2192, %v2199
        %2203 = vst [vmem:[%s165] sm:$0xff] %v2151
        %2204 = vst [vmem:[%s165 + $0x8] sm:$0xff] %v2200
        %s2205 = sand.u32 %s94, 1
        %s2206 = scalar_lea.sflag [#allocation4], %s2205
        %s2207 = sand.u32 %s94, 1
        %s2208 = smul.addr %s2207, 16
        %s2209 = scalar_lea.vmem [#allocation3], %s2208
        // Predicated region
        $region33: #{tpu_custom_call.1} parent=31 // pred_check
          %p2210 = pneg %p104
        $region34: #{tpu_custom_call.1} parent=31 // pred_check_branch
          %2212 = sbr.rel (%p2210) target = $region36
        $region35: #{tpu_custom_call.1} parent=31 // pred_region
          %s2213 = smul.u32 16, %s18
          %s2215 = ssub.s32 256, 256
          %2216 = vsyncadd %s2206, %s2215
          %s2217 = smul.addr %s2213, 16
          %s2218 = scalar_lea.hbm %s3, %s2217
          %s2220 = sshll.u32 %s2209, 4
          %s2221 = int_to_ptr.vmem [resolvable:$true] %s2220
          %2223 = dma.vmem_to_hbm [thread:$0]  %s2221, 256, %s2218, %s2206
        $region36: #{tpu_custom_call.1} parent=31 // pred_fallthru
          _
      $region32: #{tpu_custom_call.1} parent=5 // pred_fallthru
        _
      %p2224 = scmp.le.s32.totalorder 2, %s13
      // Predicated region
      $region37: #{tpu_custom_call.1} parent=5 // pred_check
        %p2225 = pneg %p2224
      $region38: #{tpu_custom_call.1} parent=5 // pred_check_branch
        %2227 = sbr.rel (%p2225) target = $region40
      $region39: #{tpu_custom_call.1} parent=5 // pred_region
        %s2228 = ssub.s32 %s13, 2
        // Predicated region
        $region41: #{tpu_custom_call.1} parent=39 // pred_check
          %p2229 = pneg %p110
        $region42: #{tpu_custom_call.1} parent=39 // pred_check_branch
          %2231 = sbr.rel (%p2229) target = $region44
        $region43: #{tpu_custom_call.1} parent=39 // pred_region
          %s2232 = sand.u32 %s95, 1
          %s2233 = scalar_lea.sflag [#allocation4], %s2232
          %s2234 = sand.u32 %s95, 1
          %s2235 = smul.addr %s2234, 16
          %s2236 = scalar_lea.vmem [#allocation3], %s2235
          %2237 = dma.done %s2233, 256
        $region44: #{tpu_custom_call.1} parent=39 // pred_fallthru
          _
      $region40: #{tpu_custom_call.1} parent=5 // pred_fallthru
        _
    $region6: #{tpu_custom_call.1} parent=1 // loop_footer
      %s17 = sadd.s32 1, %s13
    $region7: #{tpu_custom_call.1} parent=1 // loop_footer_branch
      %12 = sbr.rel target = $region3
    $region8: #{tpu_custom_call.1} parent=1 // loop_exit
      _
    %2238 = vsyncpa [#allocation4], 1
    %s2239 = scalar_lea.sflag [#allocation4], 1
    %2240 = vsyncpa %s2239, 1

</llo_original>
